<compile_context>
chip_gen: v7x
topology: tpu7x:2x2x1
jax: 0.10.0
libtpu: 0.0.40
codegen_flags: <defaults>
</compile_context>

<pallas_src>
import functools

import jax
import jax.numpy as jnp
from jax import lax
from jax.experimental import pallas as pl
from jax.experimental.pallas import tpu as pltpu


def _lstm_chunk_kernel(x_ref, wih_ref, whh_ref, b_ref, wfc_ref, bfc_ref,
                       out_ref, h_scr, c_scr, *, chunk_len, batch, hidden_dim):
    """One time-chunk of the LSTM recurrence; fc + sigmoid on the last chunk.

    x_ref  : (Tc*B, D)  VMEM bf16  (time-major chunk, flattened over time/batch)
    wih_ref: (D, 4H)    VMEM bf16  (gate columns in (i, f, o, g) order)
    whh_ref: (H, 4H)    VMEM bf16
    b_ref  : (1, 4H)    VMEM f32   (b_ih + b_hh, reordered)
    wfc_ref: (H, Opad)  VMEM f32   (zero-padded to 128 lanes)
    bfc_ref: (1, Opad)  VMEM f32
    out_ref: (B, Opad)  VMEM f32   (lane-dense output slab, written on last chunk)
    h_scr/c_scr: (B, H) VMEM f32 scratch, carried across grid steps.
    """
    Tc, B, H = chunk_len, batch, hidden_dim

    @pl.when(pl.program_id(0) == 0)
    def _init():  # matches init_hidden (zeros)
        h_scr[...] = jnp.zeros_like(h_scr)
        c_scr[...] = jnp.zeros_like(c_scr)

    wih = wih_ref[...]                       # (D, 4H) bf16
    whh = whh_ref[...]                       # (H, 4H) bf16
    bias = b_ref[...]                        # (1, 4H) f32

    # Hoisted per-chunk input projection: one MXU call covers all Tc timesteps.
    xw = jnp.dot(x_ref[...], wih, preferred_element_type=jnp.float32) + bias  # (Tc*B, 4H)

    # Gate order is (i, f, o, g): tanh gate is the [3H, 4H) lane tail, sigmoid
    # lanes are the [0, 3H) prefix computed via sigmoid(x) = 0.5*tanh(0.5x)+0.5,
    # so a single EUP tanh covers the whole (B, 4H) vreg per step.
    lane = lax.broadcasted_iota(jnp.int32, (B, 4 * H), 1)
    g_lanes = lane >= 3 * H

    # h/c live in vregs across the chunk; scratch round-trip only at the edges.
    h = h_scr[...]
    c = c_scr[...]

    for tt in range(Tc):  # Tc is small & static -> full unroll for LLO visibility
        gates = xw[tt * B:(tt + 1) * B, :] + jnp.dot(
            h.astype(jnp.bfloat16), whh, preferred_element_type=jnp.float32)  # (B, 4H)
        pre = jnp.where(g_lanes, gates, 0.5 * gates)
        t_all = jnp.tanh(pre)                               # one transcendental pass
        act = jnp.where(g_lanes, t_all, 0.5 * t_all + 0.5)  # sigmoid fix-up on non-g lanes
        i_g = act[:, 0 * H:1 * H]
        f_g = act[:, 1 * H:2 * H]
        o_g = act[:, 2 * H:3 * H]
        g_g = act[:, 3 * H:4 * H]
        c = f_g * c + i_g * g_g
        h = o_g * jnp.tanh(c)

    h_scr[...] = h
    c_scr[...] = c

    @pl.when(pl.program_id(0) == pl.num_programs(0) - 1)
    def _fc():
        y = jnp.dot(h, wfc_ref[...], preferred_element_type=jnp.float32) + bfc_ref[...]
        out_ref[...] = jax.nn.sigmoid(y).astype(out_ref.dtype)


def _pick_chunk_len(T, B):
    """Smallest convenient chunk length whose (Tc*B) row count is sublane-aligned."""
    for tc in (8, 16, 32):
        if T % tc == 0 and (tc * B) % 8 == 0:
            return tc
    return T  # fall back to a single chunk (block == full extent is always legal)


def lstm_classifier_forward(x_btd, w_ih, w_hh, b_ih, b_hh, w_fc, b_fc):
    """Pallas-backed forward pass of LSTMClassifier.

    x_btd : (B, T, D) float32   (PyTorch batch_first layout)
    w_ih  : (4H, D), w_hh: (4H, H), b_ih/b_hh: (4H,)   (PyTorch nn.LSTM layout, gates i,f,g,o)
    w_fc  : (O, H),  b_fc: (O,)                         (PyTorch nn.Linear layout)
    returns (B, O) float32 = sigmoid(fc(lstm_out[:, -1, :]))
    """
    B, T, D = x_btd.shape
    H = w_ih.shape[0] // 4
    O = w_fc.shape[0]
    O_pad = ((O + 127) // 128) * 128          # lane-dense output slab width
    Tc = _pick_chunk_len(T, B)
    num_chunks = T // Tc

    def _reorder_gates(w):
        # PyTorch gate row order (i, f, g, o) -> (i, f, o, g): tanh gate last.
        return jnp.concatenate([w[:2 * H], w[3 * H:4 * H], w[2 * H:3 * H]], axis=0)

    # Glue / layout transforms in plain JAX (outside the kernel).
    x_flat = jnp.transpose(x_btd, (1, 0, 2)).reshape(T * B, D).astype(jnp.bfloat16)
    wih_t = jnp.transpose(_reorder_gates(w_ih)).astype(jnp.bfloat16)   # (D, 4H)
    whh_t = jnp.transpose(_reorder_gates(w_hh)).astype(jnp.bfloat16)   # (H, 4H)
    b = _reorder_gates(b_ih + b_hh).reshape(1, 4 * H).astype(jnp.float32)
    wfc_p = jnp.zeros((H, O_pad), jnp.float32).at[:, :O].set(
        jnp.transpose(w_fc).astype(jnp.float32))                       # (H, Opad)
    bfc_p = jnp.zeros((1, O_pad), jnp.float32).at[:, :O].set(
        b_fc.reshape(1, O).astype(jnp.float32))                        # (1, Opad)

    kernel = functools.partial(
        _lstm_chunk_kernel, chunk_len=Tc, batch=B, hidden_dim=H)

    out_pad = pl.pallas_call(
        kernel,
        out_shape=jax.ShapeDtypeStruct((B, O_pad), jnp.float32),
        grid_spec=pltpu.PrefetchScalarGridSpec(
            num_scalar_prefetch=0,
            grid=(num_chunks,),
            in_specs=[
                pl.BlockSpec((Tc * B, D), lambda t: (t, 0)),     # x: streamed per chunk
                pl.BlockSpec((D, 4 * H), lambda t: (0, 0)),      # W_ih^T: resident
                pl.BlockSpec((H, 4 * H), lambda t: (0, 0)),      # W_hh^T: resident
                pl.BlockSpec((1, 4 * H), lambda t: (0, 0)),      # fused bias
                pl.BlockSpec((H, O_pad), lambda t: (0, 0)),      # fc weight (padded)
                pl.BlockSpec((1, O_pad), lambda t: (0, 0)),      # fc bias (padded)
            ],
            out_specs=pl.BlockSpec((B, O_pad), lambda t: (0, 0)),
            scratch_shapes=[pltpu.VMEM((B, H), jnp.float32),     # h carry
                            pltpu.VMEM((B, H), jnp.float32)],    # c carry
        ),
        compiler_params=pltpu.CompilerParams(
            dimension_semantics=("arbitrary",),                  # time is sequential
            vmem_limit_bytes=32 * 1024 * 1024,
        ),
    )(x_flat, wih_t, whh_t, b, wfc_p, bfc_p)
    return out_pad[:, :O]


def _reference_forward(x_btd, w_ih, w_hh, b_ih, b_hh, w_fc, b_fc):
    """Pure-JAX f32 reference matching torch.nn.LSTM + Linear + sigmoid."""
    B, T, D = x_btd.shape
    H = w_hh.shape[1]

    def cell(carry, x_t):
        h, c = carry
        gates = x_t @ w_ih.T + h @ w_hh.T + b_ih + b_hh
        i = jax.nn.sigmoid(gates[:, 0 * H:1 * H])
        f = jax.nn.sigmoid(gates[:, 1 * H:2 * H])
        g = jnp.tanh(gates[:, 2 * H:3 * H])
        o = jax.nn.sigmoid(gates[:, 3 * H:4 * H])
        c = f * c + i * g
        h = o * jnp.tanh(c)
        return (h, c), None

    h0 = jnp.zeros((B, H), jnp.float32)
    c0 = jnp.zeros((B, H), jnp.float32)
    (hT, _), _ = lax.scan(cell, (h0, c0), jnp.transpose(x_btd, (1, 0, 2)))
    return jax.nn.sigmoid(hT @ w_fc.T + b_fc)


if __name__ == "__main__":
    # Small shapes implied by the module: (batch, seq, input_dim) -> (batch, output_dim).
    # T=16 so the time-chunked grid (Tc=8 -> 2 chunks) and the h/c scratch carry
    # are actually exercised.
    B, T, D, H, O = 2, 16, 16, 32, 4

    key = jax.random.PRNGKey(0)
    ks = jax.random.split(key, 8)
    bound = 1.0 / jnp.sqrt(jnp.float32(H))  # PyTorch default uniform(-1/sqrt(H), 1/sqrt(H))

    x = jax.random.normal(ks[0], (B, T, D), jnp.float32)
    w_ih = jax.random.uniform(ks[1], (4 * H, D), jnp.float32, -bound, bound)
    w_hh = jax.random.uniform(ks[2], (4 * H, H), jnp.float32, -bound, bound)
    b_ih = jax.random.uniform(ks[3], (4 * H,), jnp.float32, -bound, bound)
    b_hh = jax.random.uniform(ks[4], (4 * H,), jnp.float32, -bound, bound)
    w_fc = jax.random.uniform(ks[5], (O, H), jnp.float32, -bound, bound)
    b_fc = jax.random.uniform(ks[6], (O,), jnp.float32, -bound, bound)

    out = lstm_classifier_forward(x, w_ih, w_hh, b_ih, b_hh, w_fc, b_fc)
    out = jax.block_until_ready(out)

    ref = _reference_forward(x, w_ih, w_hh, b_ih, b_hh, w_fc, b_fc)
    assert out.shape == (B, O)
    # bf16 MXU operands -> relaxed tolerance vs. the f32 reference.
    assert jnp.allclose(out, ref, atol=2e-2, rtol=2e-2), "mismatch vs reference"

    print("KERNEL_OK")
</pallas_src>

<mosaic_0001>
module attributes {stable_mosaic.version = 11 : i64} {
  func.func @_lstm_chunk_kernel(%arg0: i32, %arg1: memref<16x16xbf16, #tpu.memory_space<vmem>>, %arg2: memref<16x128xbf16, #tpu.memory_space<vmem>>, %arg3: memref<32x128xbf16, #tpu.memory_space<vmem>>, %arg4: memref<1x128xf32, #tpu.memory_space<vmem>>, %arg5: memref<32x128xf32, #tpu.memory_space<vmem>>, %arg6: memref<1x128xf32, #tpu.memory_space<vmem>>, %arg7: memref<2x128xf32, #tpu.memory_space<vmem>>, %arg8: memref<2x32xf32, #tpu.memory_space<vmem>>, %arg9: memref<2x32xf32, #tpu.memory_space<vmem>>) attributes {dimension_semantics = [#tpu.dimension_semantics<arbitrary>], iteration_bounds = array<i64: 2>, scalar_prefetch = 0 : i64, scratch_operands = 2 : i64, tpu.core_type = #tpu.core_type<tc>, window_params = [{transform_indices = @transform_0, window_bounds = array<i64: 16, 16>}, {pipeline_mode = #tpu.pipeline_mode<synchronous>, transform_indices = @transform_1, window_bounds = array<i64: 16, 128>}, {pipeline_mode = #tpu.pipeline_mode<synchronous>, transform_indices = @transform_2, window_bounds = array<i64: 32, 128>}, {pipeline_mode = #tpu.pipeline_mode<synchronous>, transform_indices = @transform_3, window_bounds = array<i64: 1, 128>}, {pipeline_mode = #tpu.pipeline_mode<synchronous>, transform_indices = @transform_4, window_bounds = array<i64: 32, 128>}, {pipeline_mode = #tpu.pipeline_mode<synchronous>, transform_indices = @transform_5, window_bounds = array<i64: 1, 128>}, {pipeline_mode = #tpu.pipeline_mode<synchronous>, transform_indices = @transform_6, window_bounds = array<i64: 2, 128>}]} {
    %c0_i32 = arith.constant 0 : i32
    %0 = arith.cmpi eq, %arg0, %c0_i32 : i32
    %1 = arith.extui %0 : i1 to i32
    %c0_i32_0 = arith.constant 0 : i32
    %2 = arith.cmpi ne, %1, %c0_i32_0 : i32
    scf.if %2 {
      %cst_49 = arith.constant 0.000000e+00 : f32
      %196 = vector.broadcast %cst_49 : f32 to vector<2x32xf32>
      %c0_50 = arith.constant 0 : index
      %c0_51 = arith.constant 0 : index
      %197 = vector.load %arg8[%c0_50, %c0_51] : memref<2x32xf32, #tpu.memory_space<vmem>>, vector<2x32xf32>
      tpu.vector_store %arg8[%c0_50, %c0_51], %196 {strides = array<i32>} : memref<2x32xf32, #tpu.memory_space<vmem>>, vector<2x32xf32>,
      %cst_52 = arith.constant 0.000000e+00 : f32
      %198 = vector.broadcast %cst_52 : f32 to vector<2x32xf32>
      %c0_53 = arith.constant 0 : index
      %c0_54 = arith.constant 0 : index
      %199 = vector.load %arg9[%c0_53, %c0_54] : memref<2x32xf32, #tpu.memory_space<vmem>>, vector<2x32xf32>
      tpu.vector_store %arg9[%c0_53, %c0_54], %198 {strides = array<i32>} : memref<2x32xf32, #tpu.memory_space<vmem>>, vector<2x32xf32>,
    } else {
    }
    %c0 = arith.constant 0 : index
    %c0_1 = arith.constant 0 : index
    %3 = vector.load %arg2[%c0, %c0_1] : memref<16x128xbf16, #tpu.memory_space<vmem>>, vector<16x128xbf16>
    %c0_2 = arith.constant 0 : index
    %c0_3 = arith.constant 0 : index
    %4 = vector.load %arg3[%c0_2, %c0_3] : memref<32x128xbf16, #tpu.memory_space<vmem>>, vector<32x128xbf16>
    %c0_4 = arith.constant 0 : index
    %c0_5 = arith.constant 0 : index
    %5 = vector.load %arg4[%c0_4, %c0_5] : memref<1x128xf32, #tpu.memory_space<vmem>>, vector<1x128xf32>
    %c0_6 = arith.constant 0 : index
    %c0_7 = arith.constant 0 : index
    %6 = vector.load %arg1[%c0_6, %c0_7] : memref<16x16xbf16, #tpu.memory_space<vmem>>, vector<16x16xbf16>
    %cst = arith.constant dense<0.000000e+00> : vector<16x128xf32>
    %7 = tpu.matmul %6, %3, %cst {dimension_numbers = #tpu.dot_dimension_numbers<[1], [0], [0], [1], [0, 0, 1, 1], [], []>} : vector<16x16xbf16>, vector<16x128xbf16>, vector<16x128xf32> -> vector<16x128xf32>
    %8 = vector.broadcast %5 : vector<1x128xf32> to vector<16x128xf32>
    %9 = arith.addf %7, %8 : vector<16x128xf32>
    %10 = tpu.iota {dimensions = array<i32: 1>} : vector<2x128xi32>
    %c96_i32 = arith.constant 96 : i32
    %11 = vector.broadcast %c96_i32 : i32 to vector<2x128xi32>
    %12 = arith.cmpi sge, %10, %11 : vector<2x128xi32>
    %c0_8 = arith.constant 0 : index
    %c0_9 = arith.constant 0 : index
    %13 = vector.load %arg8[%c0_8, %c0_9] : memref<2x32xf32, #tpu.memory_space<vmem>>, vector<2x32xf32>
    %c0_10 = arith.constant 0 : index
    %c0_11 = arith.constant 0 : index
    %14 = vector.load %arg9[%c0_10, %c0_11] : memref<2x32xf32, #tpu.memory_space<vmem>>, vector<2x32xf32>
    %15 = vector.extract_strided_slice %9 {offsets = [0, 0], sizes = [2, 128], strides = [1, 1]} : vector<16x128xf32> to vector<2x128xf32>
    %16 = arith.truncf %13 : vector<2x32xf32> to vector<2x32xbf16>
    %cst_12 = arith.constant dense<0.000000e+00> : vector<2x128xf32>
    %17 = tpu.matmul %16, %4, %cst_12 {dimension_numbers = #tpu.dot_dimension_numbers<[1], [0], [0], [1], [0, 0, 1, 1], [], []>} : vector<2x32xbf16>, vector<32x128xbf16>, vector<2x128xf32> -> vector<2x128xf32>
    %18 = arith.addf %15, %17 : vector<2x128xf32>
    %cst_13 = arith.constant 5.000000e-01 : f32
    %19 = vector.broadcast %cst_13 : f32 to vector<2x128xf32>
    %20 = arith.mulf %19, %18 : vector<2x128xf32>
    %21 = arith.select %12, %18, %20 : vector<2x128xi1>, vector<2x128xf32>
    %22 = math.tanh %21 : vector<2x128xf32>
    %cst_14 = arith.constant 5.000000e-01 : f32
    %23 = vector.broadcast %cst_14 : f32 to vector<2x128xf32>
    %24 = arith.mulf %23, %22 : vector<2x128xf32>
    %cst_15 = arith.constant 5.000000e-01 : f32
    %25 = vector.broadcast %cst_15 : f32 to vector<2x128xf32>
    %26 = arith.addf %24, %25 : vector<2x128xf32>
    %27 = arith.select %12, %22, %26 : vector<2x128xi1>, vector<2x128xf32>
    %28 = vector.extract_strided_slice %27 {offsets = [0, 0], sizes = [2, 32], strides = [1, 1]} : vector<2x128xf32> to vector<2x32xf32>
    %29 = vector.extract_strided_slice %27 {offsets = [0, 32], sizes = [2, 32], strides = [1, 1]} : vector<2x128xf32> to vector<2x32xf32>
    %30 = vector.extract_strided_slice %27 {offsets = [0, 64], sizes = [2, 32], strides = [1, 1]} : vector<2x128xf32> to vector<2x32xf32>
    %31 = vector.extract_strided_slice %27 {offsets = [0, 96], sizes = [2, 32], strides = [1, 1]} : vector<2x128xf32> to vector<2x32xf32>
    %32 = arith.mulf %29, %14 : vector<2x32xf32>
    %33 = arith.mulf %28, %31 : vector<2x32xf32>
    %34 = arith.addf %32, %33 : vector<2x32xf32>
    %35 = math.tanh %34 : vector<2x32xf32>
    %36 = arith.mulf %30, %35 : vector<2x32xf32>
    %37 = vector.extract_strided_slice %9 {offsets = [2, 0], sizes = [2, 128], strides = [1, 1]} : vector<16x128xf32> to vector<2x128xf32>
    %38 = arith.truncf %36 : vector<2x32xf32> to vector<2x32xbf16>
    %cst_16 = arith.constant dense<0.000000e+00> : vector<2x128xf32>
    %39 = tpu.matmul %38, %4, %cst_16 {dimension_numbers = #tpu.dot_dimension_numbers<[1], [0], [0], [1], [0, 0, 1, 1], [], []>} : vector<2x32xbf16>, vector<32x128xbf16>, vector<2x128xf32> -> vector<2x128xf32>
    %40 = arith.addf %37, %39 : vector<2x128xf32>
    %cst_17 = arith.constant 5.000000e-01 : f32
    %41 = vector.broadcast %cst_17 : f32 to vector<2x128xf32>
    %42 = arith.mulf %41, %40 : vector<2x128xf32>
    %43 = arith.select %12, %40, %42 : vector<2x128xi1>, vector<2x128xf32>
    %44 = math.tanh %43 : vector<2x128xf32>
    %cst_18 = arith.constant 5.000000e-01 : f32
    %45 = vector.broadcast %cst_18 : f32 to vector<2x128xf32>
    %46 = arith.mulf %45, %44 : vector<2x128xf32>
    %cst_19 = arith.constant 5.000000e-01 : f32
    %47 = vector.broadcast %cst_19 : f32 to vector<2x128xf32>
    %48 = arith.addf %46, %47 : vector<2x128xf32>
    %49 = arith.select %12, %44, %48 : vector<2x128xi1>, vector<2x128xf32>
    %50 = vector.extract_strided_slice %49 {offsets = [0, 0], sizes = [2, 32], strides = [1, 1]} : vector<2x128xf32> to vector<2x32xf32>
    %51 = vector.extract_strided_slice %49 {offsets = [0, 32], sizes = [2, 32], strides = [1, 1]} : vector<2x128xf32> to vector<2x32xf32>
    %52 = vector.extract_strided_slice %49 {offsets = [0, 64], sizes = [2, 32], strides = [1, 1]} : vector<2x128xf32> to vector<2x32xf32>
    %53 = vector.extract_strided_slice %49 {offsets = [0, 96], sizes = [2, 32], strides = [1, 1]} : vector<2x128xf32> to vector<2x32xf32>
    %54 = arith.mulf %51, %34 : vector<2x32xf32>
    %55 = arith.mulf %50, %53 : vector<2x32xf32>
    %56 = arith.addf %54, %55 : vector<2x32xf32>
    %57 = math.tanh %56 : vector<2x32xf32>
    %58 = arith.mulf %52, %57 : vector<2x32xf32>
    %59 = vector.extract_strided_slice %9 {offsets = [4, 0], sizes = [2, 128], strides = [1, 1]} : vector<16x128xf32> to vector<2x128xf32>
    %60 = arith.truncf %58 : vector<2x32xf32> to vector<2x32xbf16>
    %cst_20 = arith.constant dense<0.000000e+00> : vector<2x128xf32>
    %61 = tpu.matmul %60, %4, %cst_20 {dimension_numbers = #tpu.dot_dimension_numbers<[1], [0], [0], [1], [0, 0, 1, 1], [], []>} : vector<2x32xbf16>, vector<32x128xbf16>, vector<2x128xf32> -> vector<2x128xf32>
    %62 = arith.addf %59, %61 : vector<2x128xf32>
    %cst_21 = arith.constant 5.000000e-01 : f32
    %63 = vector.broadcast %cst_21 : f32 to vector<2x128xf32>
    %64 = arith.mulf %63, %62 : vector<2x128xf32>
    %65 = arith.select %12, %62, %64 : vector<2x128xi1>, vector<2x128xf32>
    %66 = math.tanh %65 : vector<2x128xf32>
    %cst_22 = arith.constant 5.000000e-01 : f32
    %67 = vector.broadcast %cst_22 : f32 to vector<2x128xf32>
    %68 = arith.mulf %67, %66 : vector<2x128xf32>
    %cst_23 = arith.constant 5.000000e-01 : f32
    %69 = vector.broadcast %cst_23 : f32 to vector<2x128xf32>
    %70 = arith.addf %68, %69 : vector<2x128xf32>
    %71 = arith.select %12, %66, %70 : vector<2x128xi1>, vector<2x128xf32>
    %72 = vector.extract_strided_slice %71 {offsets = [0, 0], sizes = [2, 32], strides = [1, 1]} : vector<2x128xf32> to vector<2x32xf32>
    %73 = vector.extract_strided_slice %71 {offsets = [0, 32], sizes = [2, 32], strides = [1, 1]} : vector<2x128xf32> to vector<2x32xf32>
    %74 = vector.extract_strided_slice %71 {offsets = [0, 64], sizes = [2, 32], strides = [1, 1]} : vector<2x128xf32> to vector<2x32xf32>
    %75 = vector.extract_strided_slice %71 {offsets = [0, 96], sizes = [2, 32], strides = [1, 1]} : vector<2x128xf32> to vector<2x32xf32>
    %76 = arith.mulf %73, %56 : vector<2x32xf32>
    %77 = arith.mulf %72, %75 : vector<2x32xf32>
    %78 = arith.addf %76, %77 : vector<2x32xf32>
    %79 = math.tanh %78 : vector<2x32xf32>
    %80 = arith.mulf %74, %79 : vector<2x32xf32>
    %81 = vector.extract_strided_slice %9 {offsets = [6, 0], sizes = [2, 128], strides = [1, 1]} : vector<16x128xf32> to vector<2x128xf32>
    %82 = arith.truncf %80 : vector<2x32xf32> to vector<2x32xbf16>
    %cst_24 = arith.constant dense<0.000000e+00> : vector<2x128xf32>
    %83 = tpu.matmul %82, %4, %cst_24 {dimension_numbers = #tpu.dot_dimension_numbers<[1], [0], [0], [1], [0, 0, 1, 1], [], []>} : vector<2x32xbf16>, vector<32x128xbf16>, vector<2x128xf32> -> vector<2x128xf32>
    %84 = arith.addf %81, %83 : vector<2x128xf32>
    %cst_25 = arith.constant 5.000000e-01 : f32
    %85 = vector.broadcast %cst_25 : f32 to vector<2x128xf32>
    %86 = arith.mulf %85, %84 : vector<2x128xf32>
    %87 = arith.select %12, %84, %86 : vector<2x128xi1>, vector<2x128xf32>
    %88 = math.tanh %87 : vector<2x128xf32>
    %cst_26 = arith.constant 5.000000e-01 : f32
    %89 = vector.broadcast %cst_26 : f32 to vector<2x128xf32>
    %90 = arith.mulf %89, %88 : vector<2x128xf32>
    %cst_27 = arith.constant 5.000000e-01 : f32
    %91 = vector.broadcast %cst_27 : f32 to vector<2x128xf32>
    %92 = arith.addf %90, %91 : vector<2x128xf32>
    %93 = arith.select %12, %88, %92 : vector<2x128xi1>, vector<2x128xf32>
    %94 = vector.extract_strided_slice %93 {offsets = [0, 0], sizes = [2, 32], strides = [1, 1]} : vector<2x128xf32> to vector<2x32xf32>
    %95 = vector.extract_strided_slice %93 {offsets = [0, 32], sizes = [2, 32], strides = [1, 1]} : vector<2x128xf32> to vector<2x32xf32>
    %96 = vector.extract_strided_slice %93 {offsets = [0, 64], sizes = [2, 32], strides = [1, 1]} : vector<2x128xf32> to vector<2x32xf32>
    %97 = vector.extract_strided_slice %93 {offsets = [0, 96], sizes = [2, 32], strides = [1, 1]} : vector<2x128xf32> to vector<2x32xf32>
    %98 = arith.mulf %95, %78 : vector<2x32xf32>
    %99 = arith.mulf %94, %97 : vector<2x32xf32>
    %100 = arith.addf %98, %99 : vector<2x32xf32>
    %101 = math.tanh %100 : vector<2x32xf32>
    %102 = arith.mulf %96, %101 : vector<2x32xf32>
    %103 = vector.extract_strided_slice %9 {offsets = [8, 0], sizes = [2, 128], strides = [1, 1]} : vector<16x128xf32> to vector<2x128xf32>
    %104 = arith.truncf %102 : vector<2x32xf32> to vector<2x32xbf16>
    %cst_28 = arith.constant dense<0.000000e+00> : vector<2x128xf32>
    %105 = tpu.matmul %104, %4, %cst_28 {dimension_numbers = #tpu.dot_dimension_numbers<[1], [0], [0], [1], [0, 0, 1, 1], [], []>} : vector<2x32xbf16>, vector<32x128xbf16>, vector<2x128xf32> -> vector<2x128xf32>
    %106 = arith.addf %103, %105 : vector<2x128xf32>
    %cst_29 = arith.constant 5.000000e-01 : f32
    %107 = vector.broadcast %cst_29 : f32 to vector<2x128xf32>
    %108 = arith.mulf %107, %106 : vector<2x128xf32>
    %109 = arith.select %12, %106, %108 : vector<2x128xi1>, vector<2x128xf32>
    %110 = math.tanh %109 : vector<2x128xf32>
    %cst_30 = arith.constant 5.000000e-01 : f32
    %111 = vector.broadcast %cst_30 : f32 to vector<2x128xf32>
    %112 = arith.mulf %111, %110 : vector<2x128xf32>
    %cst_31 = arith.constant 5.000000e-01 : f32
    %113 = vector.broadcast %cst_31 : f32 to vector<2x128xf32>
    %114 = arith.addf %112, %113 : vector<2x128xf32>
    %115 = arith.select %12, %110, %114 : vector<2x128xi1>, vector<2x128xf32>
    %116 = vector.extract_strided_slice %115 {offsets = [0, 0], sizes = [2, 32], strides = [1, 1]} : vector<2x128xf32> to vector<2x32xf32>
    %117 = vector.extract_strided_slice %115 {offsets = [0, 32], sizes = [2, 32], strides = [1, 1]} : vector<2x128xf32> to vector<2x32xf32>
    %118 = vector.extract_strided_slice %115 {offsets = [0, 64], sizes = [2, 32], strides = [1, 1]} : vector<2x128xf32> to vector<2x32xf32>
    %119 = vector.extract_strided_slice %115 {offsets = [0, 96], sizes = [2, 32], strides = [1, 1]} : vector<2x128xf32> to vector<2x32xf32>
    %120 = arith.mulf %117, %100 : vector<2x32xf32>
    %121 = arith.mulf %116, %119 : vector<2x32xf32>
    %122 = arith.addf %120, %121 : vector<2x32xf32>
    %123 = math.tanh %122 : vector<2x32xf32>
    %124 = arith.mulf %118, %123 : vector<2x32xf32>
    %125 = vector.extract_strided_slice %9 {offsets = [10, 0], sizes = [2, 128], strides = [1, 1]} : vector<16x128xf32> to vector<2x128xf32>
    %126 = arith.truncf %124 : vector<2x32xf32> to vector<2x32xbf16>
    %cst_32 = arith.constant dense<0.000000e+00> : vector<2x128xf32>
    %127 = tpu.matmul %126, %4, %cst_32 {dimension_numbers = #tpu.dot_dimension_numbers<[1], [0], [0], [1], [0, 0, 1, 1], [], []>} : vector<2x32xbf16>, vector<32x128xbf16>, vector<2x128xf32> -> vector<2x128xf32>
    %128 = arith.addf %125, %127 : vector<2x128xf32>
    %cst_33 = arith.constant 5.000000e-01 : f32
    %129 = vector.broadcast %cst_33 : f32 to vector<2x128xf32>
    %130 = arith.mulf %129, %128 : vector<2x128xf32>
    %131 = arith.select %12, %128, %130 : vector<2x128xi1>, vector<2x128xf32>
    %132 = math.tanh %131 : vector<2x128xf32>
    %cst_34 = arith.constant 5.000000e-01 : f32
    %133 = vector.broadcast %cst_34 : f32 to vector<2x128xf32>
    %134 = arith.mulf %133, %132 : vector<2x128xf32>
    %cst_35 = arith.constant 5.000000e-01 : f32
    %135 = vector.broadcast %cst_35 : f32 to vector<2x128xf32>
    %136 = arith.addf %134, %135 : vector<2x128xf32>
    %137 = arith.select %12, %132, %136 : vector<2x128xi1>, vector<2x128xf32>
    %138 = vector.extract_strided_slice %137 {offsets = [0, 0], sizes = [2, 32], strides = [1, 1]} : vector<2x128xf32> to vector<2x32xf32>
    %139 = vector.extract_strided_slice %137 {offsets = [0, 32], sizes = [2, 32], strides = [1, 1]} : vector<2x128xf32> to vector<2x32xf32>
    %140 = vector.extract_strided_slice %137 {offsets = [0, 64], sizes = [2, 32], strides = [1, 1]} : vector<2x128xf32> to vector<2x32xf32>
    %141 = vector.extract_strided_slice %137 {offsets = [0, 96], sizes = [2, 32], strides = [1, 1]} : vector<2x128xf32> to vector<2x32xf32>
    %142 = arith.mulf %139, %122 : vector<2x32xf32>
    %143 = arith.mulf %138, %141 : vector<2x32xf32>
    %144 = arith.addf %142, %143 : vector<2x32xf32>
    %145 = math.tanh %144 : vector<2x32xf32>
    %146 = arith.mulf %140, %145 : vector<2x32xf32>
    %147 = vector.extract_strided_slice %9 {offsets = [12, 0], sizes = [2, 128], strides = [1, 1]} : vector<16x128xf32> to vector<2x128xf32>
    %148 = arith.truncf %146 : vector<2x32xf32> to vector<2x32xbf16>
    %cst_36 = arith.constant dense<0.000000e+00> : vector<2x128xf32>
    %149 = tpu.matmul %148, %4, %cst_36 {dimension_numbers = #tpu.dot_dimension_numbers<[1], [0], [0], [1], [0, 0, 1, 1], [], []>} : vector<2x32xbf16>, vector<32x128xbf16>, vector<2x128xf32> -> vector<2x128xf32>
    %150 = arith.addf %147, %149 : vector<2x128xf32>
    %cst_37 = arith.constant 5.000000e-01 : f32
    %151 = vector.broadcast %cst_37 : f32 to vector<2x128xf32>
    %152 = arith.mulf %151, %150 : vector<2x128xf32>
    %153 = arith.select %12, %150, %152 : vector<2x128xi1>, vector<2x128xf32>
    %154 = math.tanh %153 : vector<2x128xf32>
    %cst_38 = arith.constant 5.000000e-01 : f32
    %155 = vector.broadcast %cst_38 : f32 to vector<2x128xf32>
    %156 = arith.mulf %155, %154 : vector<2x128xf32>
    %cst_39 = arith.constant 5.000000e-01 : f32
    %157 = vector.broadcast %cst_39 : f32 to vector<2x128xf32>
    %158 = arith.addf %156, %157 : vector<2x128xf32>
    %159 = arith.select %12, %154, %158 : vector<2x128xi1>, vector<2x128xf32>
    %160 = vector.extract_strided_slice %159 {offsets = [0, 0], sizes = [2, 32], strides = [1, 1]} : vector<2x128xf32> to vector<2x32xf32>
    %161 = vector.extract_strided_slice %159 {offsets = [0, 32], sizes = [2, 32], strides = [1, 1]} : vector<2x128xf32> to vector<2x32xf32>
    %162 = vector.extract_strided_slice %159 {offsets = [0, 64], sizes = [2, 32], strides = [1, 1]} : vector<2x128xf32> to vector<2x32xf32>
    %163 = vector.extract_strided_slice %159 {offsets = [0, 96], sizes = [2, 32], strides = [1, 1]} : vector<2x128xf32> to vector<2x32xf32>
    %164 = arith.mulf %161, %144 : vector<2x32xf32>
    %165 = arith.mulf %160, %163 : vector<2x32xf32>
    %166 = arith.addf %164, %165 : vector<2x32xf32>
    %167 = math.tanh %166 : vector<2x32xf32>
    %168 = arith.mulf %162, %167 : vector<2x32xf32>
    %169 = vector.extract_strided_slice %9 {offsets = [14, 0], sizes = [2, 128], strides = [1, 1]} : vector<16x128xf32> to vector<2x128xf32>
    %170 = arith.truncf %168 : vector<2x32xf32> to vector<2x32xbf16>
    %cst_40 = arith.constant dense<0.000000e+00> : vector<2x128xf32>
    %171 = tpu.matmul %170, %4, %cst_40 {dimension_numbers = #tpu.dot_dimension_numbers<[1], [0], [0], [1], [0, 0, 1, 1], [], []>} : vector<2x32xbf16>, vector<32x128xbf16>, vector<2x128xf32> -> vector<2x128xf32>
    %172 = arith.addf %169, %171 : vector<2x128xf32>
    %cst_41 = arith.constant 5.000000e-01 : f32
    %173 = vector.broadcast %cst_41 : f32 to vector<2x128xf32>
    %174 = arith.mulf %173, %172 : vector<2x128xf32>
    %175 = arith.select %12, %172, %174 : vector<2x128xi1>, vector<2x128xf32>
    %176 = math.tanh %175 : vector<2x128xf32>
    %cst_42 = arith.constant 5.000000e-01 : f32
    %177 = vector.broadcast %cst_42 : f32 to vector<2x128xf32>
    %178 = arith.mulf %177, %176 : vector<2x128xf32>
    %cst_43 = arith.constant 5.000000e-01 : f32
    %179 = vector.broadcast %cst_43 : f32 to vector<2x128xf32>
    %180 = arith.addf %178, %179 : vector<2x128xf32>
    %181 = arith.select %12, %176, %180 : vector<2x128xi1>, vector<2x128xf32>
    %182 = vector.extract_strided_slice %181 {offsets = [0, 0], sizes = [2, 32], strides = [1, 1]} : vector<2x128xf32> to vector<2x32xf32>
    %183 = vector.extract_strided_slice %181 {offsets = [0, 32], sizes = [2, 32], strides = [1, 1]} : vector<2x128xf32> to vector<2x32xf32>
    %184 = vector.extract_strided_slice %181 {offsets = [0, 64], sizes = [2, 32], strides = [1, 1]} : vector<2x128xf32> to vector<2x32xf32>
    %185 = vector.extract_strided_slice %181 {offsets = [0, 96], sizes = [2, 32], strides = [1, 1]} : vector<2x128xf32> to vector<2x32xf32>
    %186 = arith.mulf %183, %166 : vector<2x32xf32>
    %187 = arith.mulf %182, %185 : vector<2x32xf32>
    %188 = arith.addf %186, %187 : vector<2x32xf32>
    %189 = math.tanh %188 : vector<2x32xf32>
    %190 = arith.mulf %184, %189 : vector<2x32xf32>
    %c0_44 = arith.constant 0 : index
    %c0_45 = arith.constant 0 : index
    %191 = vector.load %arg8[%c0_44, %c0_45] : memref<2x32xf32, #tpu.memory_space<vmem>>, vector<2x32xf32>
    tpu.vector_store %arg8[%c0_44, %c0_45], %190 {strides = array<i32>} : memref<2x32xf32, #tpu.memory_space<vmem>>, vector<2x32xf32>,
    %c0_46 = arith.constant 0 : index
    %c0_47 = arith.constant 0 : index
    %192 = vector.load %arg9[%c0_46, %c0_47] : memref<2x32xf32, #tpu.memory_space<vmem>>, vector<2x32xf32>
    tpu.vector_store %arg9[%c0_46, %c0_47], %188 {strides = array<i32>} : memref<2x32xf32, #tpu.memory_space<vmem>>, vector<2x32xf32>,
    %c1_i32 = arith.constant 1 : i32
    %193 = arith.cmpi eq, %arg0, %c1_i32 : i32
    %194 = arith.extui %193 : i1 to i32
    %c0_i32_48 = arith.constant 0 : i32
    %195 = arith.cmpi ne, %194, %c0_i32_48 : i32
    scf.if %195 {
      %c0_49 = arith.constant 0 : index
      %c0_50 = arith.constant 0 : index
      %196 = vector.load %arg5[%c0_49, %c0_50] : memref<32x128xf32, #tpu.memory_space<vmem>>, vector<32x128xf32>
      %cst_51 = arith.constant dense<0.000000e+00> : vector<2x128xf32>
      %197 = tpu.matmul %190, %196, %cst_51 {dimension_numbers = #tpu.dot_dimension_numbers<[1], [0], [0], [1], [0, 0, 1, 1], [], []>} : vector<2x32xf32>, vector<32x128xf32>, vector<2x128xf32> -> vector<2x128xf32>
      %c0_52 = arith.constant 0 : index
      %c0_53 = arith.constant 0 : index
      %198 = vector.load %arg6[%c0_52, %c0_53] : memref<1x128xf32, #tpu.memory_space<vmem>>, vector<1x128xf32>
      %199 = vector.broadcast %198 : vector<1x128xf32> to vector<2x128xf32>
      %200 = arith.addf %197, %199 : vector<2x128xf32>
      %201 = arith.negf %200 : vector<2x128xf32>
      %202 = math.exp %201 : vector<2x128xf32>
      %cst_54 = arith.constant 1.000000e+00 : f32
      %203 = vector.broadcast %cst_54 : f32 to vector<2x128xf32>
      %204 = arith.addf %203, %202 : vector<2x128xf32>
      %205 = arith.divf %203, %204 : vector<2x128xf32>
      %c0_55 = arith.constant 0 : index
      %c0_56 = arith.constant 0 : index
      %206 = vector.load %arg7[%c0_55, %c0_56] : memref<2x128xf32, #tpu.memory_space<vmem>>, vector<2x128xf32>
      tpu.vector_store %arg7[%c0_55, %c0_56], %205 {strides = array<i32>} : memref<2x128xf32, #tpu.memory_space<vmem>>, vector<2x128xf32>,
    } else {
    }
    return
  }
  func.func @transform_0(%arg0: i32) -> (i32, i32) {
    %c0_i32 = arith.constant 0 : i32
    %c0_i32_0 = arith.constant 0 : i32
    return %arg0, %c0_i32 : i32, i32
  }
  func.func @transform_1(%arg0: i32) -> (i32, i32) {
    %c0_i32 = arith.constant 0 : i32
    %c0_i32_0 = arith.constant 0 : i32
    %c0_i32_1 = arith.constant 0 : i32
    return %c0_i32, %c0_i32_0 : i32, i32
  }
  func.func @transform_2(%arg0: i32) -> (i32, i32) {
    %c0_i32 = arith.constant 0 : i32
    %c0_i32_0 = arith.constant 0 : i32
    %c0_i32_1 = arith.constant 0 : i32
    return %c0_i32, %c0_i32_0 : i32, i32
  }
  func.func @transform_3(%arg0: i32) -> (i32, i32) {
    %c0_i32 = arith.constant 0 : i32
    %c0_i32_0 = arith.constant 0 : i32
    %c0_i32_1 = arith.constant 0 : i32
    return %c0_i32, %c0_i32_0 : i32, i32
  }
  func.func @transform_4(%arg0: i32) -> (i32, i32) {
    %c0_i32 = arith.constant 0 : i32
    %c0_i32_0 = arith.constant 0 : i32
    %c0_i32_1 = arith.constant 0 : i32
    return %c0_i32, %c0_i32_0 : i32, i32
  }
  func.func @transform_5(%arg0: i32) -> (i32, i32) {
    %c0_i32 = arith.constant 0 : i32
    %c0_i32_0 = arith.constant 0 : i32
    %c0_i32_1 = arith.constant 0 : i32
    return %c0_i32, %c0_i32_0 : i32, i32
  }
  func.func @transform_6(%arg0: i32) -> (i32, i32) {
    %c0_i32 = arith.constant 0 : i32
    %c0_i32_0 = arith.constant 0 : i32
    %c0_i32_1 = arith.constant 0 : i32
    return %c0_i32, %c0_i32_0 : i32, i32
  }
}

</mosaic_0001>

<llo_original>
// kernel: tpu_custom_call.1
$region0: #{tpu_custom_call.1}
  #allocation0 [shape = 'u32[]', space=smem, size = 0x4, offset = 0x4, fixed_abs, tag = 'smem constant byte address 0x4 - core index']
  #allocation1 [shape = 'u32[144,128]{1,0:T(1,128)}', space=vmem, size = 0x12000, scoped, tag = 'internal scratch']
  #allocation2 [shape = 'f32[2,32]{1,0:T(2,128)}', space=vmem, size = 0x400, scoped, tag = 'scratch operand']
  #allocation3 [shape = 'f32[2,32]{1,0:T(2,128)}', space=vmem, size = 0x400, scoped, tag = 'scratch operand']
  %s0 = inlined_call_operand.vmem [shape: bf16[32,16], index: 0, kind: input, shape index: {}]
  %s1 = inlined_call_operand.hbm [shape: bf16[16,128], index: 1, kind: input, shape index: {}]
  %s2 = inlined_call_operand.hbm [shape: bf16[32,128], index: 2, kind: input, shape index: {}]
  %s3 = inlined_call_operand.vmem [shape: f32[1,128], index: 3, kind: input, shape index: {}]
  %s4 = inlined_call_operand.vmem [shape: f32[32,128], index: 4, kind: input, shape index: {}]
  %s5 = inlined_call_operand.vmem [shape: f32[1,128], index: 5, kind: input, shape index: {}]
  %s6 = inlined_call_operand.hbm [shape: f32[2,128], index: 6, kind: output, shape index: {}]
  %s7 = sld [smem:[#allocation0]]
  $region73: #{tpu_custom_call.1} parent=0
    _
  %s9 = ssub.s32 1, %s7
  %s10 = scalar_select 0, %s9, %s7
  $region1: #{tpu_custom_call.1} parent=0
    #allocation4 [shape = 'u8[4096]{0}', space=vmem, size = 0x1000, scoped, tag = 'input window, operand 1, single buffered']
    #allocation5 [shape = 's32[2]{0}', space=sflag, size = 0x8, scoped, tag = 'scoped memory for tpu_custom_call.1']
    #allocation6 [shape = 's32[2]{0}', space=sflag, size = 0x8, scoped, tag = 'scoped memory for tpu_custom_call.1']
    #allocation7 [shape = 'u8[8192]{0}', space=vmem, size = 0x2000, scoped, tag = 'input window, operand 2, single buffered']
    #allocation8 [shape = 's32[1]{0}', space=sflag, size = 0x4, scoped, tag = 'scoped memory for tpu_custom_call.1']
    #allocation9 [shape = 'u8[1024]{0}', space=vmem, size = 0x400, scoped, tag = 'output window, operand 0, single buffered']
    %11 = vsyncpa [#allocation5], 0
    %12 = vsyncpa [#allocation8], 0
    %13 = vsyncpa [#allocation6], 0
    loop: start=0, step=1, limit=4
    $region2: #{tpu_custom_call.1} parent=1 // loop_pre_header
      _
    $region3: #{tpu_custom_call.1} parent=1 // loop_header
      %s15 = sphi 0, %s19
      %p16 = scmp.ge.s32.totalorder %s15, 4
      %s25 = sphi 0, %s27
      %s28 = sphi 0, %s25
      %s29 = sphi 0, %s28
      %s45 = sphi 0, %s29
      %s49 = sphi 0, %s49
      %s51 = sphi 0, %s49
      %s52 = sphi 0, %s51
      %s66 = sphi 0, %s52
      %s70 = sphi 0, %s70
      %s72 = sphi 0, %s70
      %s73 = sphi 0, %s72
      %s87 = sphi 0, %s73
      %s91 = sphi 0, %s91
      %s93 = sphi 0, %s91
      %s94 = sphi 0, %s93
      %s108 = sphi 0, %s94
      %s112 = sphi 0, %s112
      %s114 = sphi 0, %s112
      %s115 = sphi 0, %s114
      %s129 = sphi 0, %s115
      %s133 = sphi 0, %s133
      %s135 = sphi 0, %s133
      %s136 = sphi 0, %s135
      %s150 = sphi 0, %s136
      %s154 = sphi 0, %s154
      %s156 = sphi 0, %s154
      %s157 = sphi 0, %s156
      %s171 = sphi 0, %s157
    $region4: #{tpu_custom_call.1} parent=1 // loop_header_branch
      %18 = sbr.rel (%p16) target = $region8
    $region5: #{tpu_custom_call.1} parent=1 // loop_body
      %s20 = ssub.s32 %s15, 1
      %s21 = ssub.s32 %s15, 2
      %s22 = sadd.s32 %s15, 1
      %s23 = ssub.s32 %s15, %s22
      %p24 = scmp.eq.s32.totalorder %s23, 0
      %s26 = sadd.s32 %s25, 1
      %s27 = scalar_select %p24, %s25, %s26
      %p30 = pneg %p24
      %p31 = scmp.eq.s32.totalorder %s15, 1
      %p32 = por %p30, %p31
      %p33 = scmp.ne.s32.totalorder %s25, %s28
      %p34 = scmp.eq.s32.totalorder %s15, 0
      %p35 = por %p33, %p34
      %p36 = scmp.ne.s32.totalorder %s25, %s28
      %p37 = scmp.eq.s32.totalorder %s20, 1
      %p38 = por %p36, %p37
      %p39 = scmp.ne.s32.totalorder %s28, %s29
      %p40 = scmp.eq.s32.totalorder %s20, 0
      %p41 = por %p39, %p40
      %p42 = scmp.ne.s32.totalorder %s28, %s29
      %p43 = scmp.eq.s32.totalorder %s21, 1
      %p44 = por %p42, %p43
      %p46 = scmp.ne.s32.totalorder %s29, %s45
      %p47 = scmp.eq.s32.totalorder %s21, 0
      %p48 = por %p46, %p47
      %s50 = sadd.s32 %s49, 1
      %p53 = scmp.eq.s32.totalorder %s15, 1
      %p54 = scmp.ne.s32.totalorder %s49, %s51
      %p55 = scmp.eq.s32.totalorder %s15, 0
      %p56 = por %p54, %p55
      %p57 = scmp.ne.s32.totalorder %s49, %s51
      %p58 = scmp.eq.s32.totalorder %s20, 1
      %p59 = por %p57, %p58
      %p60 = scmp.ne.s32.totalorder %s51, %s52
      %p61 = scmp.eq.s32.totalorder %s20, 0
      %p62 = por %p60, %p61
      %p63 = scmp.ne.s32.totalorder %s51, %s52
      %p64 = scmp.eq.s32.totalorder %s21, 1
      %p65 = por %p63, %p64
      %p67 = scmp.ne.s32.totalorder %s52, %s66
      %p68 = scmp.eq.s32.totalorder %s21, 0
      %p69 = por %p67, %p68
      %s71 = sadd.s32 %s70, 1
      %p74 = scmp.eq.s32.totalorder %s15, 1
      %p75 = scmp.ne.s32.totalorder %s70, %s72
      %p76 = scmp.eq.s32.totalorder %s15, 0
      %p77 = por %p75, %p76
      %p78 = scmp.ne.s32.totalorder %s70, %s72
      %p79 = scmp.eq.s32.totalorder %s20, 1
      %p80 = por %p78, %p79
      %p81 = scmp.ne.s32.totalorder %s72, %s73
      %p82 = scmp.eq.s32.totalorder %s20, 0
      %p83 = por %p81, %p82
      %p84 = scmp.ne.s32.totalorder %s72, %s73
      %p85 = scmp.eq.s32.totalorder %s21, 1
      %p86 = por %p84, %p85
      %p88 = scmp.ne.s32.totalorder %s73, %s87
      %p89 = scmp.eq.s32.totalorder %s21, 0
      %p90 = por %p88, %p89
      %s92 = sadd.s32 %s91, 1
      %p95 = scmp.eq.s32.totalorder %s15, 1
      %p96 = scmp.ne.s32.totalorder %s91, %s93
      %p97 = scmp.eq.s32.totalorder %s15, 0
      %p98 = por %p96, %p97
      %p99 = scmp.ne.s32.totalorder %s91, %s93
      %p100 = scmp.eq.s32.totalorder %s20, 1
      %p101 = por %p99, %p100
      %p102 = scmp.ne.s32.totalorder %s93, %s94
      %p103 = scmp.eq.s32.totalorder %s20, 0
      %p104 = por %p102, %p103
      %p105 = scmp.ne.s32.totalorder %s93, %s94
      %p106 = scmp.eq.s32.totalorder %s21, 1
      %p107 = por %p105, %p106
      %p109 = scmp.ne.s32.totalorder %s94, %s108
      %p110 = scmp.eq.s32.totalorder %s21, 0
      %p111 = por %p109, %p110
      %s113 = sadd.s32 %s112, 1
      %p116 = scmp.eq.s32.totalorder %s15, 1
      %p117 = scmp.ne.s32.totalorder %s112, %s114
      %p118 = scmp.eq.s32.totalorder %s15, 0
      %p119 = por %p117, %p118
      %p120 = scmp.ne.s32.totalorder %s112, %s114
      %p121 = scmp.eq.s32.totalorder %s20, 1
      %p122 = por %p120, %p121
      %p123 = scmp.ne.s32.totalorder %s114, %s115
      %p124 = scmp.eq.s32.totalorder %s20, 0
      %p125 = por %p123, %p124
      %p126 = scmp.ne.s32.totalorder %s114, %s115
      %p127 = scmp.eq.s32.totalorder %s21, 1
      %p128 = por %p126, %p127
      %p130 = scmp.ne.s32.totalorder %s115, %s129
      %p131 = scmp.eq.s32.totalorder %s21, 0
      %p132 = por %p130, %p131
      %s134 = sadd.s32 %s133, 1
      %p137 = scmp.eq.s32.totalorder %s15, 1
      %p138 = scmp.ne.s32.totalorder %s133, %s135
      %p139 = scmp.eq.s32.totalorder %s15, 0
      %p140 = por %p138, %p139
      %p141 = scmp.ne.s32.totalorder %s133, %s135
      %p142 = scmp.eq.s32.totalorder %s20, 1
      %p143 = por %p141, %p142
      %p144 = scmp.ne.s32.totalorder %s135, %s136
      %p145 = scmp.eq.s32.totalorder %s20, 0
      %p146 = por %p144, %p145
      %p147 = scmp.ne.s32.totalorder %s135, %s136
      %p148 = scmp.eq.s32.totalorder %s21, 1
      %p149 = por %p147, %p148
      %p151 = scmp.ne.s32.totalorder %s136, %s150
      %p152 = scmp.eq.s32.totalorder %s21, 0
      %p153 = por %p151, %p152
      %s155 = sadd.s32 %s154, 1
      %p158 = scmp.eq.s32.totalorder %s15, 1
      %p159 = scmp.ne.s32.totalorder %s154, %s156
      %p160 = scmp.eq.s32.totalorder %s15, 0
      %p161 = por %p159, %p160
      %p162 = scmp.ne.s32.totalorder %s154, %s156
      %p163 = scmp.eq.s32.totalorder %s20, 1
      %p164 = por %p162, %p163
      %p165 = scmp.ne.s32.totalorder %s156, %s157
      %p166 = scmp.eq.s32.totalorder %s20, 0
      %p167 = por %p165, %p166
      %p168 = scmp.ne.s32.totalorder %s156, %s157
      %p169 = scmp.eq.s32.totalorder %s21, 1
      %p170 = por %p168, %p169
      %p172 = scmp.ne.s32.totalorder %s157, %s171
      %p173 = scmp.eq.s32.totalorder %s21, 0
      %p174 = por %p172, %p173
      %p175 = scmp.le.s32.totalorder 1, %s15
      %p176 = scmp.lt.s32.totalorder %s15, 3
      %p177 = pnand %p175, %p176
      %p178 = pneg %p177
      // Predicated region
      $region9: #{tpu_custom_call.1} parent=5 // pred_check
        _
      $region10: #{tpu_custom_call.1} parent=5 // pred_check_branch
        %180 = sbr.rel (%p177) target = $region12
      $region11: #{tpu_custom_call.1} parent=5 // pred_region
        %s181 = ssub.s32 %s15, 1
        // Predicated region
        $region13: #{tpu_custom_call.1} parent=11 // pred_check
          %p182 = pneg %p62
        $region14: #{tpu_custom_call.1} parent=11 // pred_check_branch
          %184 = sbr.rel (%p182) target = $region16
        $region15: #{tpu_custom_call.1} parent=11 // pred_region
          %s186 = ssub.s32 128, 128
          %187 = vsyncadd [#allocation5], %s186
          %s188 = sshll.u32 [#allocation4], 4
          %s189 = int_to_ptr.vmem [resolvable:$true] %s188
          %194 = dma.hbm_to_vmem [thread:$0]  %s1, 128, %s189, [#allocation5], 64, 64, 4
        $region16: #{tpu_custom_call.1} parent=11 // pred_fallthru
          _
        // Predicated region
        $region17: #{tpu_custom_call.1} parent=11 // pred_check
          %p195 = pneg %p83
        $region18: #{tpu_custom_call.1} parent=11 // pred_check_branch
          %197 = sbr.rel (%p195) target = $region20
        $region19: #{tpu_custom_call.1} parent=11 // pred_region
          %s199 = ssub.s32 256, 256
          %200 = vsyncadd [#allocation8], %s199
          %s201 = sshll.u32 [#allocation7], 4
          %s202 = int_to_ptr.vmem [resolvable:$true] %s201
          %207 = dma.hbm_to_vmem [thread:$0]  %s2, 256, %s202, [#allocation8], 64, 64, 4
        $region20: #{tpu_custom_call.1} parent=11 // pred_fallthru
          _
        // Predicated region
        $region21: #{tpu_custom_call.1} parent=11 // pred_check
          %p208 = pneg %p104
        $region22: #{tpu_custom_call.1} parent=11 // pred_check_branch
          %210 = sbr.rel (%p208) target = $region24
        $region23: #{tpu_custom_call.1} parent=11 // pred_region
          _
        $region24: #{tpu_custom_call.1} parent=11 // pred_fallthru
          _
        // Predicated region
        $region25: #{tpu_custom_call.1} parent=11 // pred_check
          %p211 = pneg %p125
        $region26: #{tpu_custom_call.1} parent=11 // pred_check_branch
          %213 = sbr.rel (%p211) target = $region28
        $region27: #{tpu_custom_call.1} parent=11 // pred_region
          _
        $region28: #{tpu_custom_call.1} parent=11 // pred_fallthru
          _
        // Predicated region
        $region29: #{tpu_custom_call.1} parent=11 // pred_check
          %p214 = pneg %p146
        $region30: #{tpu_custom_call.1} parent=11 // pred_check_branch
          %216 = sbr.rel (%p214) target = $region32
        $region31: #{tpu_custom_call.1} parent=11 // pred_region
          _
        $region32: #{tpu_custom_call.1} parent=11 // pred_fallthru
          _
      $region12: #{tpu_custom_call.1} parent=5 // pred_fallthru
        _
      %p217 = scmp.lt.s32.totalorder %s15, 2
      // Predicated region
      $region33: #{tpu_custom_call.1} parent=5 // pred_check
        %p218 = pneg %p217
      $region34: #{tpu_custom_call.1} parent=5 // pred_check_branch
        %220 = sbr.rel (%p218) target = $region36
      $region35: #{tpu_custom_call.1} parent=5 // pred_region
        // Predicated region
        $region37: #{tpu_custom_call.1} parent=35 // pred_check
          %p221 = pneg %p35
        $region38: #{tpu_custom_call.1} parent=35 // pred_check_branch
          %223 = sbr.rel (%p221) target = $region40
        $region39: #{tpu_custom_call.1} parent=35 // pred_region
          %s224 = smul.u32 2, %s15
          %p225 = scmp.lt.s32.totalorder %s224, 3
          %s226 = scalar_select %p225, %s224, 3
          %s227 = smul.addr %s226, 4
          %s228 = scalar_lea.vmem %s0, %s227
          %s229 = smul.u32 2, %s15
        $region40: #{tpu_custom_call.1} parent=35 // pred_fallthru
          _
      $region36: #{tpu_custom_call.1} parent=5 // pred_fallthru
        _
      %p230 = scmp.le.s32.totalorder 1, %s15
      %p231 = scmp.lt.s32.totalorder %s15, 3
      %p232 = pnand %p230, %p231
      %p233 = pneg %p232
      // Predicated region
      $region41: #{tpu_custom_call.1} parent=5 // pred_check
        _
      $region42: #{tpu_custom_call.1} parent=5 // pred_check_branch
        %235 = sbr.rel (%p232) target = $region44
      $region43: #{tpu_custom_call.1} parent=5 // pred_region
        %s236 = ssub.s32 %s15, 1
        // Predicated region
        $region45: #{tpu_custom_call.1} parent=43 // pred_check
          %p237 = pneg %p62
        $region46: #{tpu_custom_call.1} parent=43 // pred_check_branch
          %239 = sbr.rel (%p237) target = $region48
        $region47: #{tpu_custom_call.1} parent=43 // pred_region
          %240 = dma.done [#allocation5], 128
        $region48: #{tpu_custom_call.1} parent=43 // pred_fallthru
          _
        // Predicated region
        $region49: #{tpu_custom_call.1} parent=43 // pred_check
          %p241 = pneg %p83
        $region50: #{tpu_custom_call.1} parent=43 // pred_check_branch
          %243 = sbr.rel (%p241) target = $region52
        $region51: #{tpu_custom_call.1} parent=43 // pred_region
          %244 = dma.done [#allocation8], 256
        $region52: #{tpu_custom_call.1} parent=43 // pred_fallthru
          _
        %s245 = smul.u32 2, %s20
        %p246 = scmp.lt.s32.totalorder %s245, 3
        %s247 = scalar_select %p246, %s245, 3
        %s248 = smul.addr %s247, 4
        %s249 = scalar_lea.vmem %s0, %s248
        %p250 = pneg %p41
        %p251 = pneg %p38
        %p252 = pneg %p62
        %p253 = pneg %p59
        %p254 = pneg %p83
        %p255 = pneg %p80
        %p256 = pneg %p104
        %p257 = pneg %p101
        %p258 = pneg %p125
        %p259 = pneg %p122
        %p260 = pneg %p146
        %p261 = pneg %p143
        %p262 = pneg %p167
        %p263 = pneg %p164
        %s264 = smul.u32 2, %s20
        %p265 = scmp.lt.s32.totalorder %s264, 3
        %s266 = scalar_select %p265, %s264, 3
        %s267 = smul.addr %s266, 4
        %s268 = scalar_lea.vmem %s0, %s267
        %s269 = smul.u32 2, %s20
        %p271 = scmp.eq.s32.totalorder %s20, 0
        // Predicated region
        $region53: #{tpu_custom_call.1} parent=43 // pred_check
          %p272 = pneg %p271
        $region54: #{tpu_custom_call.1} parent=43 // pred_check_branch
          %274 = sbr.rel (%p272) target = $region56
        $region55: #{tpu_custom_call.1} parent=43 // pred_region
          %vm275 = vcmask 254976
          %276 = vst.msk [vmem:[#allocation2] sm:$0x3] %vm275, 0.0
          %277 = vst.msk [vmem:[#allocation3] sm:$0x3] %vm275, 0.0
        $region56: #{tpu_custom_call.1} parent=43 // pred_fallthru
          _
        %v278 = vld [vmem:[#allocation4] sm:$0xf]
        %v279 = vld [vmem:[#allocation4 + $0x4] sm:$0xf]
        %v280 = vld [vmem:[#allocation7] sm:$0xf]
        %v281 = vld [vmem:[#allocation7 + $0x4] sm:$0xf]
        %v282 = vld [vmem:[#allocation7 + $0x8] sm:$0xf]
        %v283 = vld [vmem:[#allocation7 + $0xc] sm:$0xf]
        %v284 = vld [vmem:[%s3] sm:$0x1]
        %v285 = vld [vmem:[%s268] sm:$0xf]
        %v286 = vld [vmem:[%s268 + $0x4] sm:$0xf]
        %v288 = vlaneseq
        %v289 = vshrl.u32 %v288, 7
        %v290 = vsub.s32 0, %v289
        %v291 = vrot.slane %v284, %v290
        %v295 = vunpack.c.l.b16 %v285
        %v296 = vunpack.c.l.b16 %v286
        %v297 = vpack.c.b16 %v296, %v295
        %v300 = vunpack.c.l.b16 %v278
        %v301 = vunpack.c.l.b16 %v279
        %v302 = vpack.c.b16 %v301, %v300
        %vm304 = vcmask 130048
        %v306 = vsel %vm304, %v297, 0
        %308 = vmatprep.subr.bf16.mxu0 0
        %309 = vmatpush1.bf16.msra.mxu0 %v302
        %310 = vmatprep.subr.bf16.mxu0 0
        %311 = vmatpush1.bf16.msra.mxu0 0
        %312 = vmatprep.subr.bf16.mxu0 0
        %313 = vmatpush1.bf16.msra.mxu0 0
        %314 = vmatprep.subr.bf16.mxu0 0
        %315 = vmatpush1.bf16.msra.mxu0 0
        %316 = vmatprep.subr.bf16.mxu0 0
        %317 = vmatpush1.bf16.msra.mxu0 0
        %318 = vmatprep.subr.bf16.mxu0 0
        %319 = vmatpush1.bf16.msra.mxu0 0
        %320 = vmatprep.subr.bf16.mxu0 0
        %321 = vmatpush1.bf16.msra.mxu0 0
        %322 = vmatprep.subr.bf16.mxu0 0
        %323 = vmatpush1.bf16.msra.mxu0 0
        %324 = vmatprep.subr.bf16.mxu0 0
        %325 = vmatpush1.bf16.msra.mxu0 0
        %326 = vmatprep.subr.bf16.mxu0 0
        %327 = vmatpush1.bf16.msra.mxu0 0
        %328 = vmatprep.subr.bf16.mxu0 0
        %329 = vmatpush1.bf16.msra.mxu0 0
        %330 = vmatprep.subr.bf16.mxu0 0
        %331 = vmatpush1.bf16.msra.mxu0 0
        %332 = vmatprep.subr.bf16.mxu0 0
        %333 = vmatpush1.bf16.msra.mxu0 0
        %334 = vmatprep.subr.bf16.mxu0 0
        %335 = vmatpush1.bf16.msra.mxu0 0
        %336 = vmatprep.subr.bf16.mxu0 0
        %337 = vmatpush1.bf16.msra.mxu0 0
        %338 = vmatprep.subr.bf16.mxu0 0
        %339 = vmatpush1.bf16.msra.mxu0 0
        %340 = vmatprep.mubr.bf16.mxu0 0
        %341 = vmatmul.mubr.bf16.gmra.mrb[0].mxu0 %v306
        %v342 = vpop.f32.mrb[0].mxu0
        %v343 = vadd.f32 %v291, %v342
        %v344 = vpop.f32.mrb[0].mxu0
        %v345 = vpop.f32.mrb[0].mxu0
        %v346 = vadd.f32 %v291, %v345
        %v347 = vpop.f32.mrb[0].mxu0
        %348 = vdwg.mxu0
        %v349 = vlaneseq
        %v350 = vand.u32 %v349, 127
        %vm351 = vcmp.ge.s32.totalorder %v350, 96
        %v352 = vld [vmem:[#allocation2] sm:$0x3]
        %v353 = vld [vmem:[#allocation3] sm:$0x3]
        %v354 = vpack.c.bf16 %v352, %v352
        %v359 = vunpack.c.l.b16 %v280
        %v360 = vunpack.c.l.b16 %v281
        %v361 = vunpack.c.l.b16 %v282
        %v362 = vunpack.c.l.b16 %v283
        %v363 = vpack.c.b16 %v360, %v359
        %v364 = vpack.c.b16 %v362, %v361
        %vm367 = vcmask 261120
        %v369 = vsel %vm367, %v354, 0
        %371 = vmatprep.subr.bf16.mxu0 0
        %372 = vmatpush1.bf16.msra.mxu0 %v363
        %373 = vmatprep.subr.bf16.mxu0 0
        %374 = vmatpush1.bf16.msra.mxu0 %v364
        %375 = vmatprep.subr.bf16.mxu0 0
        %376 = vmatpush1.bf16.msra.mxu0 0
        %377 = vmatprep.subr.bf16.mxu0 0
        %378 = vmatpush1.bf16.msra.mxu0 0
        %379 = vmatprep.subr.bf16.mxu0 0
        %380 = vmatpush1.bf16.msra.mxu0 0
        %381 = vmatprep.subr.bf16.mxu0 0
        %382 = vmatpush1.bf16.msra.mxu0 0
        %383 = vmatprep.subr.bf16.mxu0 0
        %384 = vmatpush1.bf16.msra.mxu0 0
        %385 = vmatprep.subr.bf16.mxu0 0
        %386 = vmatpush1.bf16.msra.mxu0 0
        %387 = vmatprep.subr.bf16.mxu0 0
        %388 = vmatpush1.bf16.msra.mxu0 0
        %389 = vmatprep.subr.bf16.mxu0 0
        %390 = vmatpush1.bf16.msra.mxu0 0
        %391 = vmatprep.subr.bf16.mxu0 0
        %392 = vmatpush1.bf16.msra.mxu0 0
        %393 = vmatprep.subr.bf16.mxu0 0
        %394 = vmatpush1.bf16.msra.mxu0 0
        %395 = vmatprep.subr.bf16.mxu0 0
        %396 = vmatpush1.bf16.msra.mxu0 0
        %397 = vmatprep.subr.bf16.mxu0 0
        %398 = vmatpush1.bf16.msra.mxu0 0
        %399 = vmatprep.subr.bf16.mxu0 0
        %400 = vmatpush1.bf16.msra.mxu0 0
        %401 = vmatprep.subr.bf16.mxu0 0
        %402 = vmatpush1.bf16.msra.mxu0 0
        %403 = vmatprep.mubr.bf16.mxu0 0
        %404 = vmatmul.mubr.bf16.gmra.mrb[0].mxu0 %v369
        %v405 = vpop.f32.mrb[0].mxu0
        %v406 = vadd.f32 0.0, %v405
        %v407 = vpop.f32.mrb[0].mxu0
        %v408 = vpop.f32.mrb[0].mxu0
        %v409 = vpop.f32.mrb[0].mxu0
        %410 = vdwg.mxu0
        %v411 = vadd.f32 %v343, %v406
        %v412 = vmul.f32 %v411, 0.5
        %v413 = vsel %vm351, %v411, %v412
        %v414 = vtanh.pop %v413
        %v415 = vmul.f32 %v414, 0.5
        %v416 = vadd.f32 %v415, 0.5
        %v417 = vsel %vm351, %v414, %v416
        %419 = vrot.lane.b32.xlu0 %v353, 32
        %v420 = vpop.permute.xlu0 %419
        %v422 = vmul.f32 %v417, %v420
        %424 = vrot.lane.b32.xlu0 %v417, 32
        %v425 = vpop.permute.xlu0 %424
        %v427 = vmul.f32 %v417, %v425
        %429 = vrot.lane.b32.xlu0 %v427, 32
        %v430 = vpop.permute.xlu0 %429
        %v432 = vadd.f32 %v422, %v430
        %v433 = vtanh.pop %v432
        %435 = vrot.lane.b32.xlu0 %v433, 32
        %v436 = vpop.permute.xlu0 %435
        %v438 = vmul.f32 %v417, %v436
        %v439 = vpack.c.bf16 %v438, %v438
        %441 = vrot.lane.b32.xlu0 %v439, 64
        %v442 = vpop.permute.xlu0 %441
        %v444 = vsel %vm367, %v442, 0
        %446 = vmatprep.subr.bf16.mxu0 0
        %447 = vmatpush1.bf16.msra.mxu0 %v363
        %448 = vmatprep.subr.bf16.mxu0 0
        %449 = vmatpush1.bf16.msra.mxu0 %v364
        %450 = vmatprep.subr.bf16.mxu0 0
        %451 = vmatpush1.bf16.msra.mxu0 0
        %452 = vmatprep.subr.bf16.mxu0 0
        %453 = vmatpush1.bf16.msra.mxu0 0
        %454 = vmatprep.subr.bf16.mxu0 0
        %455 = vmatpush1.bf16.msra.mxu0 0
        %456 = vmatprep.subr.bf16.mxu0 0
        %457 = vmatpush1.bf16.msra.mxu0 0
        %458 = vmatprep.subr.bf16.mxu0 0
        %459 = vmatpush1.bf16.msra.mxu0 0
        %460 = vmatprep.subr.bf16.mxu0 0
        %461 = vmatpush1.bf16.msra.mxu0 0
        %462 = vmatprep.subr.bf16.mxu0 0
        %463 = vmatpush1.bf16.msra.mxu0 0
        %464 = vmatprep.subr.bf16.mxu0 0
        %465 = vmatpush1.bf16.msra.mxu0 0
        %466 = vmatprep.subr.bf16.mxu0 0
        %467 = vmatpush1.bf16.msra.mxu0 0
        %468 = vmatprep.subr.bf16.mxu0 0
        %469 = vmatpush1.bf16.msra.mxu0 0
        %470 = vmatprep.subr.bf16.mxu0 0
        %471 = vmatpush1.bf16.msra.mxu0 0
        %472 = vmatprep.subr.bf16.mxu0 0
        %473 = vmatpush1.bf16.msra.mxu0 0
        %474 = vmatprep.subr.bf16.mxu0 0
        %475 = vmatpush1.bf16.msra.mxu0 0
        %476 = vmatprep.subr.bf16.mxu0 0
        %477 = vmatpush1.bf16.msra.mxu0 0
        %478 = vmatprep.mubr.bf16.mxu0 0
        %479 = vmatmul.mubr.bf16.gmra.mrb[0].mxu0 %v444
        %v480 = vpop.f32.mrb[0].mxu0
        %v481 = vadd.f32 0.0, %v480
        %v482 = vpop.f32.mrb[0].mxu0
        %v483 = vpop.f32.mrb[0].mxu0
        %v484 = vpop.f32.mrb[0].mxu0
        %485 = vdwg.mxu0
        %v487 = vrot.slane %v481, 6
        %v489 = vadd.f32 %v343, %v487
        %v490 = vmul.f32 %v489, 0.5
        %v491 = vsel %vm351, %v489, %v490
        %v492 = vtanh.pop %v491
        %v493 = vmul.f32 %v492, 0.5
        %v494 = vadd.f32 %v493, 0.5
        %v495 = vsel %vm351, %v492, %v494
        %v497 = vrot.slane %v432, 6
        %v499 = vmul.f32 %v495, %v497
        %501 = vrot.lane.b32.xlu0 %v495, 32
        %v502 = vpop.permute.xlu0 %501
        %v504 = vmul.f32 %v495, %v502
        %506 = vrot.lane.b32.xlu0 %v504, 32
        %v507 = vpop.permute.xlu0 %506
        %v509 = vadd.f32 %v499, %v507
        %v510 = vtanh.pop %v509
        %512 = vrot.lane.b32.xlu0 %v510, 32
        %v513 = vpop.permute.xlu0 %512
        %v515 = vmul.f32 %v495, %v513
        %v516 = vpack.c.bf16 %v515, %v515
        %v518 = vrot.slane %v516, 1
        %519 = vrot.lane.b32.xlu0 %v518, 64
        %v520 = vpop.permute.xlu0 %519
        %v522 = vsel %vm367, %v520, 0
        %524 = vmatprep.subr.bf16.mxu0 0
        %525 = vmatpush1.bf16.msra.mxu0 %v363
        %526 = vmatprep.subr.bf16.mxu0 0
        %527 = vmatpush1.bf16.msra.mxu0 %v364
        %528 = vmatprep.subr.bf16.mxu0 0
        %529 = vmatpush1.bf16.msra.mxu0 0
        %530 = vmatprep.subr.bf16.mxu0 0
        %531 = vmatpush1.bf16.msra.mxu0 0
        %532 = vmatprep.subr.bf16.mxu0 0
        %533 = vmatpush1.bf16.msra.mxu0 0
        %534 = vmatprep.subr.bf16.mxu0 0
        %535 = vmatpush1.bf16.msra.mxu0 0
        %536 = vmatprep.subr.bf16.mxu0 0
        %537 = vmatpush1.bf16.msra.mxu0 0
        %538 = vmatprep.subr.bf16.mxu0 0
        %539 = vmatpush1.bf16.msra.mxu0 0
        %540 = vmatprep.subr.bf16.mxu0 0
        %541 = vmatpush1.bf16.msra.mxu0 0
        %542 = vmatprep.subr.bf16.mxu0 0
        %543 = vmatpush1.bf16.msra.mxu0 0
        %544 = vmatprep.subr.bf16.mxu0 0
        %545 = vmatpush1.bf16.msra.mxu0 0
        %546 = vmatprep.subr.bf16.mxu0 0
        %547 = vmatpush1.bf16.msra.mxu0 0
        %548 = vmatprep.subr.bf16.mxu0 0
        %549 = vmatpush1.bf16.msra.mxu0 0
        %550 = vmatprep.subr.bf16.mxu0 0
        %551 = vmatpush1.bf16.msra.mxu0 0
        %552 = vmatprep.subr.bf16.mxu0 0
        %553 = vmatpush1.bf16.msra.mxu0 0
        %554 = vmatprep.subr.bf16.mxu0 0
        %555 = vmatpush1.bf16.msra.mxu0 0
        %556 = vmatprep.mubr.bf16.mxu0 0
        %557 = vmatmul.mubr.bf16.gmra.mrb[0].mxu0 %v522
        %v558 = vpop.f32.mrb[0].mxu0
        %v559 = vadd.f32 0.0, %v558
        %v560 = vpop.f32.mrb[0].mxu0
        %v561 = vpop.f32.mrb[0].mxu0
        %v562 = vpop.f32.mrb[0].mxu0
        %563 = vdwg.mxu0
        %v565 = vrot.slane %v559, 4
        %v567 = vadd.f32 %v343, %v565
        %v568 = vmul.f32 %v567, 0.5
        %v569 = vsel %vm351, %v567, %v568
        %v570 = vtanh.pop %v569
        %v571 = vmul.f32 %v570, 0.5
        %v572 = vadd.f32 %v571, 0.5
        %v573 = vsel %vm351, %v570, %v572
        %v575 = vrot.slane %v509, 6
        %v577 = vmul.f32 %v573, %v575
        %579 = vrot.lane.b32.xlu0 %v573, 32
        %v580 = vpop.permute.xlu0 %579
        %v582 = vmul.f32 %v573, %v580
        %584 = vrot.lane.b32.xlu0 %v582, 32
        %v585 = vpop.permute.xlu0 %584
        %v587 = vadd.f32 %v577, %v585
        %v588 = vtanh.pop %v587
        %590 = vrot.lane.b32.xlu0 %v588, 32
        %v591 = vpop.permute.xlu0 %590
        %v593 = vmul.f32 %v573, %v591
        %v594 = vpack.c.bf16 %v593, %v593
        %v596 = vrot.slane %v594, 2
        %597 = vrot.lane.b32.xlu0 %v596, 64
        %v598 = vpop.permute.xlu0 %597
        %v600 = vsel %vm367, %v598, 0
        %602 = vmatprep.subr.bf16.mxu0 0
        %603 = vmatpush1.bf16.msra.mxu0 %v363
        %604 = vmatprep.subr.bf16.mxu0 0
        %605 = vmatpush1.bf16.msra.mxu0 %v364
        %606 = vmatprep.subr.bf16.mxu0 0
        %607 = vmatpush1.bf16.msra.mxu0 0
        %608 = vmatprep.subr.bf16.mxu0 0
        %609 = vmatpush1.bf16.msra.mxu0 0
        %610 = vmatprep.subr.bf16.mxu0 0
        %611 = vmatpush1.bf16.msra.mxu0 0
        %612 = vmatprep.subr.bf16.mxu0 0
        %613 = vmatpush1.bf16.msra.mxu0 0
        %614 = vmatprep.subr.bf16.mxu0 0
        %615 = vmatpush1.bf16.msra.mxu0 0
        %616 = vmatprep.subr.bf16.mxu0 0
        %617 = vmatpush1.bf16.msra.mxu0 0
        %618 = vmatprep.subr.bf16.mxu0 0
        %619 = vmatpush1.bf16.msra.mxu0 0
        %620 = vmatprep.subr.bf16.mxu0 0
        %621 = vmatpush1.bf16.msra.mxu0 0
        %622 = vmatprep.subr.bf16.mxu0 0
        %623 = vmatpush1.bf16.msra.mxu0 0
        %624 = vmatprep.subr.bf16.mxu0 0
        %625 = vmatpush1.bf16.msra.mxu0 0
        %626 = vmatprep.subr.bf16.mxu0 0
        %627 = vmatpush1.bf16.msra.mxu0 0
        %628 = vmatprep.subr.bf16.mxu0 0
        %629 = vmatpush1.bf16.msra.mxu0 0
        %630 = vmatprep.subr.bf16.mxu0 0
        %631 = vmatpush1.bf16.msra.mxu0 0
        %632 = vmatprep.subr.bf16.mxu0 0
        %633 = vmatpush1.bf16.msra.mxu0 0
        %634 = vmatprep.mubr.bf16.mxu0 0
        %635 = vmatmul.mubr.bf16.gmra.mrb[0].mxu0 %v600
        %v636 = vpop.f32.mrb[0].mxu0
        %v637 = vadd.f32 0.0, %v636
        %v638 = vpop.f32.mrb[0].mxu0
        %v639 = vpop.f32.mrb[0].mxu0
        %v640 = vpop.f32.mrb[0].mxu0
        %641 = vdwg.mxu0
        %v643 = vrot.slane %v637, 2
        %v645 = vadd.f32 %v343, %v643
        %v646 = vmul.f32 %v645, 0.5
        %v647 = vsel %vm351, %v645, %v646
        %v648 = vtanh.pop %v647
        %v649 = vmul.f32 %v648, 0.5
        %v650 = vadd.f32 %v649, 0.5
        %v651 = vsel %vm351, %v648, %v650
        %v653 = vrot.slane %v587, 6
        %v655 = vmul.f32 %v651, %v653
        %657 = vrot.lane.b32.xlu0 %v651, 32
        %v658 = vpop.permute.xlu0 %657
        %v660 = vmul.f32 %v651, %v658
        %662 = vrot.lane.b32.xlu0 %v660, 32
        %v663 = vpop.permute.xlu0 %662
        %v665 = vadd.f32 %v655, %v663
        %v666 = vtanh.pop %v665
        %668 = vrot.lane.b32.xlu0 %v666, 32
        %v669 = vpop.permute.xlu0 %668
        %v671 = vmul.f32 %v651, %v669
        %v672 = vpack.c.bf16 %v671, %v671
        %v674 = vrot.slane %v672, 3
        %675 = vrot.lane.b32.xlu0 %v674, 64
        %v676 = vpop.permute.xlu0 %675
        %v678 = vsel %vm367, %v676, 0
        %680 = vmatprep.subr.bf16.mxu0 0
        %681 = vmatpush1.bf16.msra.mxu0 %v363
        %682 = vmatprep.subr.bf16.mxu0 0
        %683 = vmatpush1.bf16.msra.mxu0 %v364
        %684 = vmatprep.subr.bf16.mxu0 0
        %685 = vmatpush1.bf16.msra.mxu0 0
        %686 = vmatprep.subr.bf16.mxu0 0
        %687 = vmatpush1.bf16.msra.mxu0 0
        %688 = vmatprep.subr.bf16.mxu0 0
        %689 = vmatpush1.bf16.msra.mxu0 0
        %690 = vmatprep.subr.bf16.mxu0 0
        %691 = vmatpush1.bf16.msra.mxu0 0
        %692 = vmatprep.subr.bf16.mxu0 0
        %693 = vmatpush1.bf16.msra.mxu0 0
        %694 = vmatprep.subr.bf16.mxu0 0
        %695 = vmatpush1.bf16.msra.mxu0 0
        %696 = vmatprep.subr.bf16.mxu0 0
        %697 = vmatpush1.bf16.msra.mxu0 0
        %698 = vmatprep.subr.bf16.mxu0 0
        %699 = vmatpush1.bf16.msra.mxu0 0
        %700 = vmatprep.subr.bf16.mxu0 0
        %701 = vmatpush1.bf16.msra.mxu0 0
        %702 = vmatprep.subr.bf16.mxu0 0
        %703 = vmatpush1.bf16.msra.mxu0 0
        %704 = vmatprep.subr.bf16.mxu0 0
        %705 = vmatpush1.bf16.msra.mxu0 0
        %706 = vmatprep.subr.bf16.mxu0 0
        %707 = vmatpush1.bf16.msra.mxu0 0
        %708 = vmatprep.subr.bf16.mxu0 0
        %709 = vmatpush1.bf16.msra.mxu0 0
        %710 = vmatprep.subr.bf16.mxu0 0
        %711 = vmatpush1.bf16.msra.mxu0 0
        %712 = vmatprep.mubr.bf16.mxu0 0
        %713 = vmatmul.mubr.bf16.gmra.mrb[0].mxu0 %v678
        %v714 = vpop.f32.mrb[0].mxu0
        %v715 = vadd.f32 0.0, %v714
        %v716 = vpop.f32.mrb[0].mxu0
        %v717 = vpop.f32.mrb[0].mxu0
        %v718 = vpop.f32.mrb[0].mxu0
        %719 = vdwg.mxu0
        %v720 = vadd.f32 %v346, %v715
        %v721 = vmul.f32 %v720, 0.5
        %v722 = vsel %vm351, %v720, %v721
        %v723 = vtanh.pop %v722
        %v724 = vmul.f32 %v723, 0.5
        %v725 = vadd.f32 %v724, 0.5
        %v726 = vsel %vm351, %v723, %v725
        %v728 = vrot.slane %v665, 6
        %v730 = vmul.f32 %v726, %v728
        %732 = vrot.lane.b32.xlu0 %v726, 32
        %v733 = vpop.permute.xlu0 %732
        %v735 = vmul.f32 %v726, %v733
        %737 = vrot.lane.b32.xlu0 %v735, 32
        %v738 = vpop.permute.xlu0 %737
        %v740 = vadd.f32 %v730, %v738
        %v741 = vtanh.pop %v740
        %743 = vrot.lane.b32.xlu0 %v741, 32
        %v744 = vpop.permute.xlu0 %743
        %v746 = vmul.f32 %v726, %v744
        %v747 = vpack.c.bf16 %v746, %v746
        %749 = vrot.lane.b32.xlu0 %v747, 64
        %v750 = vpop.permute.xlu0 %749
        %v752 = vsel %vm367, %v750, 0
        %754 = vmatprep.subr.bf16.mxu0 0
        %755 = vmatpush1.bf16.msra.mxu0 %v363
        %756 = vmatprep.subr.bf16.mxu0 0
        %757 = vmatpush1.bf16.msra.mxu0 %v364
        %758 = vmatprep.subr.bf16.mxu0 0
        %759 = vmatpush1.bf16.msra.mxu0 0
        %760 = vmatprep.subr.bf16.mxu0 0
        %761 = vmatpush1.bf16.msra.mxu0 0
        %762 = vmatprep.subr.bf16.mxu0 0
        %763 = vmatpush1.bf16.msra.mxu0 0
        %764 = vmatprep.subr.bf16.mxu0 0
        %765 = vmatpush1.bf16.msra.mxu0 0
        %766 = vmatprep.subr.bf16.mxu0 0
        %767 = vmatpush1.bf16.msra.mxu0 0
        %768 = vmatprep.subr.bf16.mxu0 0
        %769 = vmatpush1.bf16.msra.mxu0 0
        %770 = vmatprep.subr.bf16.mxu0 0
        %771 = vmatpush1.bf16.msra.mxu0 0
        %772 = vmatprep.subr.bf16.mxu0 0
        %773 = vmatpush1.bf16.msra.mxu0 0
        %774 = vmatprep.subr.bf16.mxu0 0
        %775 = vmatpush1.bf16.msra.mxu0 0
        %776 = vmatprep.subr.bf16.mxu0 0
        %777 = vmatpush1.bf16.msra.mxu0 0
        %778 = vmatprep.subr.bf16.mxu0 0
        %779 = vmatpush1.bf16.msra.mxu0 0
        %780 = vmatprep.subr.bf16.mxu0 0
        %781 = vmatpush1.bf16.msra.mxu0 0
        %782 = vmatprep.subr.bf16.mxu0 0
        %783 = vmatpush1.bf16.msra.mxu0 0
        %784 = vmatprep.subr.bf16.mxu0 0
        %785 = vmatpush1.bf16.msra.mxu0 0
        %786 = vmatprep.mubr.bf16.mxu0 0
        %787 = vmatmul.mubr.bf16.gmra.mrb[0].mxu0 %v752
        %v788 = vpop.f32.mrb[0].mxu0
        %v789 = vadd.f32 0.0, %v788
        %v790 = vpop.f32.mrb[0].mxu0
        %v791 = vpop.f32.mrb[0].mxu0
        %v792 = vpop.f32.mrb[0].mxu0
        %793 = vdwg.mxu0
        %v795 = vrot.slane %v789, 6
        %v797 = vadd.f32 %v346, %v795
        %v798 = vmul.f32 %v797, 0.5
        %v799 = vsel %vm351, %v797, %v798
        %v800 = vtanh.pop %v799
        %v801 = vmul.f32 %v800, 0.5
        %v802 = vadd.f32 %v801, 0.5
        %v803 = vsel %vm351, %v800, %v802
        %v805 = vrot.slane %v740, 6
        %v807 = vmul.f32 %v803, %v805
        %809 = vrot.lane.b32.xlu0 %v803, 32
        %v810 = vpop.permute.xlu0 %809
        %v812 = vmul.f32 %v803, %v810
        %814 = vrot.lane.b32.xlu0 %v812, 32
        %v815 = vpop.permute.xlu0 %814
        %v817 = vadd.f32 %v807, %v815
        %v818 = vtanh.pop %v817
        %820 = vrot.lane.b32.xlu0 %v818, 32
        %v821 = vpop.permute.xlu0 %820
        %v823 = vmul.f32 %v803, %v821
        %v824 = vpack.c.bf16 %v823, %v823
        %v826 = vrot.slane %v824, 1
        %827 = vrot.lane.b32.xlu0 %v826, 64
        %v828 = vpop.permute.xlu0 %827
        %v830 = vsel %vm367, %v828, 0
        %832 = vmatprep.subr.bf16.mxu0 0
        %833 = vmatpush1.bf16.msra.mxu0 %v363
        %834 = vmatprep.subr.bf16.mxu0 0
        %835 = vmatpush1.bf16.msra.mxu0 %v364
        %836 = vmatprep.subr.bf16.mxu0 0
        %837 = vmatpush1.bf16.msra.mxu0 0
        %838 = vmatprep.subr.bf16.mxu0 0
        %839 = vmatpush1.bf16.msra.mxu0 0
        %840 = vmatprep.subr.bf16.mxu0 0
        %841 = vmatpush1.bf16.msra.mxu0 0
        %842 = vmatprep.subr.bf16.mxu0 0
        %843 = vmatpush1.bf16.msra.mxu0 0
        %844 = vmatprep.subr.bf16.mxu0 0
        %845 = vmatpush1.bf16.msra.mxu0 0
        %846 = vmatprep.subr.bf16.mxu0 0
        %847 = vmatpush1.bf16.msra.mxu0 0
        %848 = vmatprep.subr.bf16.mxu0 0
        %849 = vmatpush1.bf16.msra.mxu0 0
        %850 = vmatprep.subr.bf16.mxu0 0
        %851 = vmatpush1.bf16.msra.mxu0 0
        %852 = vmatprep.subr.bf16.mxu0 0
        %853 = vmatpush1.bf16.msra.mxu0 0
        %854 = vmatprep.subr.bf16.mxu0 0
        %855 = vmatpush1.bf16.msra.mxu0 0
        %856 = vmatprep.subr.bf16.mxu0 0
        %857 = vmatpush1.bf16.msra.mxu0 0
        %858 = vmatprep.subr.bf16.mxu0 0
        %859 = vmatpush1.bf16.msra.mxu0 0
        %860 = vmatprep.subr.bf16.mxu0 0
        %861 = vmatpush1.bf16.msra.mxu0 0
        %862 = vmatprep.subr.bf16.mxu0 0
        %863 = vmatpush1.bf16.msra.mxu0 0
        %864 = vmatprep.mubr.bf16.mxu0 0
        %865 = vmatmul.mubr.bf16.gmra.mrb[0].mxu0 %v830
        %v866 = vpop.f32.mrb[0].mxu0
        %v867 = vadd.f32 0.0, %v866
        %v868 = vpop.f32.mrb[0].mxu0
        %v869 = vpop.f32.mrb[0].mxu0
        %v870 = vpop.f32.mrb[0].mxu0
        %871 = vdwg.mxu0
        %v873 = vrot.slane %v867, 4
        %v875 = vadd.f32 %v346, %v873
        %v876 = vmul.f32 %v875, 0.5
        %v877 = vsel %vm351, %v875, %v876
        %v878 = vtanh.pop %v877
        %v879 = vmul.f32 %v878, 0.5
        %v880 = vadd.f32 %v879, 0.5
        %v881 = vsel %vm351, %v878, %v880
        %v883 = vrot.slane %v817, 6
        %v885 = vmul.f32 %v881, %v883
        %887 = vrot.lane.b32.xlu0 %v881, 32
        %v888 = vpop.permute.xlu0 %887
        %v890 = vmul.f32 %v881, %v888
        %892 = vrot.lane.b32.xlu0 %v890, 32
        %v893 = vpop.permute.xlu0 %892
        %v895 = vadd.f32 %v885, %v893
        %v896 = vtanh.pop %v895
        %898 = vrot.lane.b32.xlu0 %v896, 32
        %v899 = vpop.permute.xlu0 %898
        %v901 = vmul.f32 %v881, %v899
        %v902 = vpack.c.bf16 %v901, %v901
        %v904 = vrot.slane %v902, 2
        %905 = vrot.lane.b32.xlu0 %v904, 64
        %v906 = vpop.permute.xlu0 %905
        %v908 = vsel %vm367, %v906, 0
        %910 = vmatprep.subr.bf16.mxu0 0
        %911 = vmatpush1.bf16.msra.mxu0 %v363
        %912 = vmatprep.subr.bf16.mxu0 0
        %913 = vmatpush1.bf16.msra.mxu0 %v364
        %914 = vmatprep.subr.bf16.mxu0 0
        %915 = vmatpush1.bf16.msra.mxu0 0
        %916 = vmatprep.subr.bf16.mxu0 0
        %917 = vmatpush1.bf16.msra.mxu0 0
        %918 = vmatprep.subr.bf16.mxu0 0
        %919 = vmatpush1.bf16.msra.mxu0 0
        %920 = vmatprep.subr.bf16.mxu0 0
        %921 = vmatpush1.bf16.msra.mxu0 0
        %922 = vmatprep.subr.bf16.mxu0 0
        %923 = vmatpush1.bf16.msra.mxu0 0
        %924 = vmatprep.subr.bf16.mxu0 0
        %925 = vmatpush1.bf16.msra.mxu0 0
        %926 = vmatprep.subr.bf16.mxu0 0
        %927 = vmatpush1.bf16.msra.mxu0 0
        %928 = vmatprep.subr.bf16.mxu0 0
        %929 = vmatpush1.bf16.msra.mxu0 0
        %930 = vmatprep.subr.bf16.mxu0 0
        %931 = vmatpush1.bf16.msra.mxu0 0
        %932 = vmatprep.subr.bf16.mxu0 0
        %933 = vmatpush1.bf16.msra.mxu0 0
        %934 = vmatprep.subr.bf16.mxu0 0
        %935 = vmatpush1.bf16.msra.mxu0 0
        %936 = vmatprep.subr.bf16.mxu0 0
        %937 = vmatpush1.bf16.msra.mxu0 0
        %938 = vmatprep.subr.bf16.mxu0 0
        %939 = vmatpush1.bf16.msra.mxu0 0
        %940 = vmatprep.subr.bf16.mxu0 0
        %941 = vmatpush1.bf16.msra.mxu0 0
        %942 = vmatprep.mubr.bf16.mxu0 0
        %943 = vmatmul.mubr.bf16.gmra.mrb[0].mxu0 %v908
        %v944 = vpop.f32.mrb[0].mxu0
        %v945 = vadd.f32 0.0, %v944
        %v946 = vpop.f32.mrb[0].mxu0
        %v947 = vpop.f32.mrb[0].mxu0
        %v948 = vpop.f32.mrb[0].mxu0
        %949 = vdwg.mxu0
        %v951 = vrot.slane %v945, 2
        %v953 = vadd.f32 %v346, %v951
        %v954 = vmul.f32 %v953, 0.5
        %v955 = vsel %vm351, %v953, %v954
        %v956 = vtanh.pop %v955
        %v957 = vmul.f32 %v956, 0.5
        %v958 = vadd.f32 %v957, 0.5
        %v959 = vsel %vm351, %v956, %v958
        %v961 = vrot.slane %v895, 6
        %v963 = vmul.f32 %v959, %v961
        %965 = vrot.lane.b32.xlu0 %v959, 32
        %v966 = vpop.permute.xlu0 %965
        %v968 = vmul.f32 %v959, %v966
        %970 = vrot.lane.b32.xlu0 %v968, 32
        %v971 = vpop.permute.xlu0 %970
        %v973 = vadd.f32 %v963, %v971
        %v974 = vtanh.pop %v973
        %976 = vrot.lane.b32.xlu0 %v974, 32
        %v977 = vpop.permute.xlu0 %976
        %v979 = vmul.f32 %v959, %v977
        %981 = vrot.lane.b32.xlu0 %v979, 64
        %v982 = vpop.permute.xlu0 %981
        %vm984 = vcmask 261126
        %985 = vst.msk [vmem:[#allocation2 - $0x6] sm:$0xc0] %vm984, %v982
        %987 = vrot.lane.b32.xlu0 %v973, 96
        %v988 = vpop.permute.xlu0 %987
        %990 = vst.msk [vmem:[#allocation3 - $0x6] sm:$0xc0] %vm984, %v988
        %p991 = scmp.eq.s32.totalorder %s20, 1
        // Predicated region
        $region57: #{tpu_custom_call.1} parent=43 // pred_check
          %p992 = pneg %p991
        $region58: #{tpu_custom_call.1} parent=43 // pred_check_branch
          %994 = sbr.rel (%p992) target = $region60
        $region59: #{tpu_custom_call.1} parent=43 // pred_region
          %v995 = vld [vmem:[%s4] sm:$0xff]
          %v996 = vld [vmem:[%s4 + $0x8] sm:$0xff]
          %v997 = vld [vmem:[%s4 + $0x10] sm:$0xff]
          %v998 = vld [vmem:[%s4 + $0x18] sm:$0xff]
          %v999 = vld [vmem:[%s5] sm:$0x1]
          %v1001 = vlaneseq
          %v1002 = vshrl.u32 %v1001, 7
          %v1003 = vsub.s32 0, %v1002
          %v1004 = vrot.slane %v999, %v1003
          %v1006 = vrot.slane %v979, 6
          %1007 = vrot.lane.b32.xlu0 %v1006, 64
          %v1008 = vpop.permute.xlu0 %1007
          %v1009 = vsel %vm367, %v1008, 0
          %1011 = vmatprep.subr.mxu0 0.0
          %1012 = vmatpush1.msra.mxu0 %v995
          %1013 = vmatprep.subr.mxu0 0.0
          %1014 = vmatpush1.msra.mxu0 %v996
          %1015 = vmatprep.subr.mxu0 0.0
          %1016 = vmatpush1.msra.mxu0 %v997
          %1017 = vmatprep.subr.mxu0 0.0
          %1018 = vmatpush1.msra.mxu0 %v998
          %1019 = vmatprep.subr.mxu0 0.0
          %1020 = vmatpush1.msra.mxu0 0.0
          %1021 = vmatprep.subr.mxu0 0.0
          %1022 = vmatpush1.msra.mxu0 0.0
          %1023 = vmatprep.subr.mxu0 0.0
          %1024 = vmatpush1.msra.mxu0 0.0
          %1025 = vmatprep.subr.mxu0 0.0
          %1026 = vmatpush1.msra.mxu0 0.0
          %1027 = vmatprep.subr.mxu0 0.0
          %1028 = vmatpush1.msra.mxu0 0.0
          %1029 = vmatprep.subr.mxu0 0.0
          %1030 = vmatpush1.msra.mxu0 0.0
          %1031 = vmatprep.subr.mxu0 0.0
          %1032 = vmatpush1.msra.mxu0 0.0
          %1033 = vmatprep.subr.mxu0 0.0
          %1034 = vmatpush1.msra.mxu0 0.0
          %1035 = vmatprep.subr.mxu0 0.0
          %1036 = vmatpush1.msra.mxu0 0.0
          %1037 = vmatprep.subr.mxu0 0.0
          %1038 = vmatpush1.msra.mxu0 0.0
          %1039 = vmatprep.subr.mxu0 0.0
          %1040 = vmatpush1.msra.mxu0 0.0
          %1041 = vmatprep.subr.mxu0 0.0
          %1042 = vmatpush1.msra.mxu0 0.0
          %1043 = vmatprep.subr.mxu0 0.0
          %1044 = vmatpush1.msra.mxu0 0.0
          %1045 = vmatprep.subr.mxu0 0.0
          %1046 = vmatpush1.msra.mxu0 0.0
          %1047 = vmatprep.subr.mxu0 0.0
          %1048 = vmatpush1.msra.mxu0 0.0
          %1049 = vmatprep.subr.mxu0 0.0
          %1050 = vmatpush1.msra.mxu0 0.0
          %1051 = vmatprep.subr.mxu0 0.0
          %1052 = vmatpush1.msra.mxu0 0.0
          %1053 = vmatprep.subr.mxu0 0.0
          %1054 = vmatpush1.msra.mxu0 0.0
          %1055 = vmatprep.subr.mxu0 0.0
          %1056 = vmatpush1.msra.mxu0 0.0
          %1057 = vmatprep.subr.mxu0 0.0
          %1058 = vmatpush1.msra.mxu0 0.0
          %1059 = vmatprep.subr.mxu0 0.0
          %1060 = vmatpush1.msra.mxu0 0.0
          %1061 = vmatprep.subr.mxu0 0.0
          %1062 = vmatpush1.msra.mxu0 0.0
          %1063 = vmatprep.subr.mxu0 0.0
          %1064 = vmatpush1.msra.mxu0 0.0
          %1065 = vmatprep.subr.mxu0 0.0
          %1066 = vmatpush1.msra.mxu0 0.0
          %1067 = vmatprep.subr.mxu0 0.0
          %1068 = vmatpush1.msra.mxu0 0.0
          %1069 = vmatprep.subr.mxu0 0.0
          %1070 = vmatpush1.msra.mxu0 0.0
          %1071 = vmatprep.subr.mxu0 0.0
          %1072 = vmatpush1.msra.mxu0 0.0
          %1073 = vmatprep.subr.mxu0 0.0
          %1074 = vmatpush1.msra.mxu0 0.0
          %1075 = vmatprep.mubr.f32.mxu0 0.0
          %1076 = vmatmul.mubr.f32.gmra.mrb[0].mxu0 %v1009
          %v1077 = vpop.f32.mrb[0].mxu0
          %v1078 = vadd.f32 %v1004, %v1077
          %v1079 = vpop.f32.mrb[0].mxu0
          %1080 = vdwg.mxu0
          %v1081 = vxor.u32 %v1078, 2147483648
          %v1082 = vmul.f32 %v1081, 1.442695
          %v1083 = vpow.pop %v1082
          %v1084 = vadd.f32 %v1083, 1.0
          %v1085 = vrcp.pop %v1084
          %v1086 = vmul.f32 1.0, %v1085
          %1087 = vst [vmem:[#allocation9] sm:$0x3] %v1086
        $region60: #{tpu_custom_call.1} parent=43 // pred_fallthru
          _
        // Predicated region
        $region61: #{tpu_custom_call.1} parent=43 // pred_check
          %p1088 = pneg %p164
        $region62: #{tpu_custom_call.1} parent=43 // pred_check_branch
          %1090 = sbr.rel (%p1088) target = $region64
        $region63: #{tpu_custom_call.1} parent=43 // pred_region
          %s1092 = ssub.s32 32, 32
          %1093 = vsyncadd [#allocation6], %s1092
          %s1095 = sshll.u32 [#allocation9], 4
          %s1096 = int_to_ptr.vmem [resolvable:$true] %s1095
          %1098 = dma.vmem_to_hbm [thread:$0]  %s1096, 32, %s6, [#allocation6]
        $region64: #{tpu_custom_call.1} parent=43 // pred_fallthru
          _
        // Predicated region
        $region65: #{tpu_custom_call.1} parent=43 // pred_check
          %p1099 = pneg %p164
        $region66: #{tpu_custom_call.1} parent=43 // pred_check_branch
          %1101 = sbr.rel (%p1099) target = $region68
        $region67: #{tpu_custom_call.1} parent=43 // pred_region
          %1102 = dma.done [#allocation6], 32
        $region68: #{tpu_custom_call.1} parent=43 // pred_fallthru
          _
      $region44: #{tpu_custom_call.1} parent=5 // pred_fallthru
        _
      %p1103 = scmp.le.s32.totalorder 2, %s15
      // Predicated region
      $region69: #{tpu_custom_call.1} parent=5 // pred_check
        %p1104 = pneg %p1103
      $region70: #{tpu_custom_call.1} parent=5 // pred_check_branch
        %1106 = sbr.rel (%p1104) target = $region72
      $region71: #{tpu_custom_call.1} parent=5 // pred_region
        %s1107 = ssub.s32 %s15, 2
      $region72: #{tpu_custom_call.1} parent=5 // pred_fallthru
        _
    $region6: #{tpu_custom_call.1} parent=1 // loop_footer
      %s19 = sadd.s32 1, %s15
    $region7: #{tpu_custom_call.1} parent=1 // loop_footer_branch
      %14 = sbr.rel target = $region3
    $region8: #{tpu_custom_call.1} parent=1 // loop_exit
      _
    %1108 = vsyncpa [#allocation5], 1
    %s1109 = scalar_lea.sflag [#allocation5], 1
    %1110 = vsyncpa %s1109, 1
    %1111 = vsyncpa [#allocation8], 1
    %1112 = vsyncpa [#allocation6], 1
    %s1113 = scalar_lea.sflag [#allocation6], 1
    %1114 = vsyncpa %s1113, 1

</llo_original>
